<compile_context>
chip_gen: v5e
topology: v5e:2x2
jax: 0.10.0
libtpu: 0.0.40
codegen_flags: <defaults>
</compile_context>

<pallas_src>
import functools
import math

import jax
import jax.numpy as jnp
import numpy as np
from jax import lax
from jax.experimental import pallas as pl
from jax.experimental.pallas import tpu as pltpu

EPS = 1e-7


def _boundary_partials_kernel(pred_ref, gt_ref, out_ref, *,
                              theta0, theta, W, TH, halo, H, use_bf16):
    """Process one (lane-block, H-strip) tile.

    pred_ref: (1, C, Hs, LB) f32 logits   (Hs = TH + 2*halo rounded up to 8)
    gt_ref:   (1, Hs, LB)    i32 labels
    out_ref:  (1, 4, C, LB)  f32 partial sums over this strip's interior rows:
              [0] sum pred_b * gt_b_ext   [1] sum pred_b
              [2] sum pred_b_ext * gt_b   [3] sum gt_b
    """
    _, C, Hs, LB = pred_ref.shape
    r0 = (theta0 - 1) // 2
    r1 = (theta - 1) // 2
    rmax = max(r0, r1)
    cdtype = jnp.bfloat16 if use_bf16 else jnp.float32
    f32 = jnp.float32

    # ---- row bookkeeping: which local rows are inside the image, and which
    # are owned by this strip (only owned rows are counted in the sums).
    h = pl.program_id(1)
    lrow = lax.broadcasted_iota(jnp.int32, (1, Hs, 1), 1)
    grow = h * TH - halo + lrow                       # global image row
    row_valid = (grow >= 0) & (grow < H)
    row_interior = row_valid & (lrow >= halo) & (lrow < halo + TH)

    # ---- lane (column) validity masks, hoisted and shared by all pools.
    # Columns cross samples every W lanes, so the lane pass must stay masked.
    cols = lax.broadcasted_iota(jnp.int32, (1, 1, LB), 2) % W
    col_valid = {}
    for d in range(-rmax, rmax + 1):
        if d != 0:
            col_valid[d] = (cols + d >= 0) & (cols + d < W)

    def same_maxpool(x, r):
        # Separable stride-1 'same' max pool for NON-NEGATIVE x only:
        # out-of-window neighbours are replaced by 0, which matches torch's
        # -inf padding because x >= 0 and the window centre is always
        # in-bounds.  Row pass is UNMASKED: wrap-around only corrupts the
        # first/last r local rows of the strip, and the halo guarantees those
        # never reach the interior rows (directly, or through the second
        # pool) nor the sums.
        out = x
        for d in range(-r, r + 1):
            if d == 0:
                continue
            out = jnp.maximum(out, pltpu.roll(x, (-d) % Hs, axis=1))
        # Column pass: masked (cross-sample / out-of-image columns -> 0).
        rowpooled = out
        for d in range(-r, r + 1):
            if d == 0:
                continue
            y = pltpu.roll(rowpooled, (-d) % LB, axis=2)
            out = jnp.maximum(out, jnp.where(col_valid[d], y, 0.0))
        return out

    # ---- softmax over channels; approximate reciprocal on the EUP plus one
    # Newton step (denominator is in [1, C], so this is safe and ~f32 exact).
    logits = pred_ref[0]                               # (C, Hs, LB)
    m = jnp.max(logits, axis=0, keepdims=True)
    e = jnp.exp(logits - m)
    denom = jnp.sum(e, axis=0, keepdims=True)
    rinv = pl.reciprocal(denom, approx=True)
    rinv = rinv * (2.0 - denom * rinv)
    prob = e * rinv

    # ---- one-hot ground truth (clamped to [0, C-1], as in the PyTorch code).
    gt = jnp.clip(gt_ref[0], 0, C - 1)                 # (Hs, LB)
    ch = lax.broadcasted_iota(jnp.int32, (C, 1, 1), 0)
    one_hot = (ch == gt[None, :, :]).astype(f32)

    # Rows outside the image must contribute nothing to any pool -> zero them
    # once (these 2 selects replace the 12 per-pool row-mask selects).
    # TODO(synk): validate Mosaic sublane-roll lowering for packed bf16 before
    # enabling use_bf16 by default (v6e/v7x only; keep f32 on v5e).
    inv_gt = jnp.where(row_valid, 1.0 - one_hot, 0.0).astype(cdtype)
    inv_pred = jnp.where(row_valid, 1.0 - prob, 0.0).astype(cdtype)

    gt_b = same_maxpool(inv_gt, r0) - inv_gt           # >= 0
    pred_b = same_maxpool(inv_pred, r0) - inv_pred     # >= 0
    # Re-zero out-of-image rows so they do not leak into the second pool.
    gt_b = jnp.where(row_valid, gt_b, 0.0)
    pred_b = jnp.where(row_valid, pred_b, 0.0)

    # Interior-only (owned-row) copies feed the sums; halo rows belong to the
    # neighbouring strips.  Sums / products are kept in f32.
    pb_int = jnp.where(row_interior, pred_b.astype(f32), 0.0)
    gb_int = jnp.where(row_interior, gt_b.astype(f32), 0.0)
    out_ref[0, 1, :, :] = jnp.sum(pb_int, axis=1)
    out_ref[0, 3, :, :] = jnp.sum(gb_int, axis=1)

    gt_b_ext = same_maxpool(gt_b, r1)
    out_ref[0, 0, :, :] = jnp.sum(pb_int * gt_b_ext.astype(f32), axis=1)
    pred_b_ext = same_maxpool(pred_b, r1)
    out_ref[0, 2, :, :] = jnp.sum(gb_int * pred_b_ext.astype(f32), axis=1)


def _round_up(x, m):
    return ((x + m - 1) // m) * m


def _vmem_capacity_bytes():
    try:
        return int(pltpu.get_tpu_info().vmem_capacity_bytes)
    except Exception:
        return 64 * 1024 * 1024          # conservative fallback (v7x per-core)


def _strip_rows(th, halo):
    return _round_up(th + 2 * halo, 8)


def _vmem_need_bytes(nb, th, C, W, halo):
    hs = _strip_rows(th, halo)
    lb = nb * W
    map_bytes = C * hs * lb * 4
    # Double-buffered pred/gt input tiles and the out tile, plus ~7 truly-live
    # f32 intermediate maps (prob, one-hot/inv maps, boundary maps, roll tmp).
    io = 2 * (map_bytes + hs * lb * 4 + 4 * C * lb * 4)
    return io + 7 * map_bytes


def _choose_tiling(N, C, H, W, halo, vmem_cap, max_rows=None):
    """Pick (NB samples per lane block, TH rows per H strip)."""
    nb_align = 1 if W % 128 == 0 else math.lcm(W, 128) // W
    NB = N if N <= nb_align else nb_align
    budget = int(0.70 * vmem_cap)

    # H strip: use the full height if it fits, otherwise halve (8-aligned).
    TH = H if max_rows is None else min(H, max_rows)
    while TH > 8 and _vmem_need_bytes(NB, TH, C, W, halo) > budget:
        TH = max(8, _round_up(TH // 2, 8))
    G_h = -(-H // TH)

    # Grow the lane block (amortize per-step overhead) while it fits VMEM and
    # we keep >= 2 total grid steps (pipelining / v7x megacore stay engaged).
    if N > nb_align:
        while True:
            nb2 = NB * 2
            if nb2 > N:
                break
            if (-(-N // nb2)) * G_h < 2:
                break
            if _vmem_need_bytes(nb2, TH, C, W, halo) > budget:
                break
            NB = nb2
    return NB, TH


def boundary_loss(pred, gt, theta0=3, theta=5, *,
                  use_bf16_intermediates=False, _max_rows_per_strip=None):
    """pred: (N, C, H, W) float logits; gt: (N, H, W) int labels."""
    assert theta0 % 2 == 1 and theta % 2 == 1, "kernel sizes must be odd"
    if gt.ndim == 4 and gt.shape[1] == 1:          # mirror torch.squeeze(gt)
        gt = gt[:, 0]
    N, C, H, W = pred.shape
    pred = pred.astype(jnp.float32)
    gt = gt.astype(jnp.int32)

    r0 = (theta0 - 1) // 2
    r1 = (theta - 1) // 2
    halo = r0 + r1

    vmem_cap = _vmem_capacity_bytes()
    NB, TH = _choose_tiling(N, C, H, W, halo, vmem_cap,
                            max_rows=_max_rows_per_strip)
    Hs = _strip_rows(TH, halo)
    G_lane = -(-N // NB)
    G_h = -(-H // TH)
    Np = G_lane * NB
    LB = NB * W

    if Np != N:
        # TODO(synk): padded samples compute throwaway partials (sliced off in
        # the epilogue); pick NB | N or mask in-kernel to avoid wasted work.
        pred = jnp.pad(pred, ((0, Np - N), (0, 0), (0, 0), (0, 0)))
        gt = jnp.pad(gt, ((0, Np - N), (0, 0), (0, 0)))

    # Pack samples along the lane axis, pad H for the halo + strip tail, then
    # materialize the overlapping H strips (wrapper-side layout plumbing so
    # the kernel keeps plain auto-pipelined BlockSpecs).
    pred_packed = jnp.transpose(pred, (1, 2, 0, 3)).reshape(C, H, Np * W)
    gt_packed = jnp.transpose(gt, (1, 0, 2)).reshape(H, Np * W)
    pad_top = halo
    pad_bot = (G_h - 1) * TH + Hs - halo - H
    pred_packed = jnp.pad(pred_packed, ((0, 0), (pad_top, pad_bot), (0, 0)))
    gt_packed = jnp.pad(gt_packed, ((pad_top, pad_bot), (0, 0)))
    pred_strips = jnp.stack(
        [pred_packed[:, g * TH:g * TH + Hs, :] for g in range(G_h)], axis=0)
    gt_strips = jnp.stack(
        [gt_packed[g * TH:g * TH + Hs, :] for g in range(G_h)], axis=0)

    vmem_need = _vmem_need_bytes(NB, TH, C, W, halo)
    vmem_limit = min(int(0.9 * vmem_cap), max(32 * 1024 * 1024, 2 * vmem_need))

    kernel = functools.partial(
        _boundary_partials_kernel, theta0=theta0, theta=theta, W=W, TH=TH,
        halo=halo, H=H, use_bf16=use_bf16_intermediates)
    partials = pl.pallas_call(
        kernel,
        out_shape=jax.ShapeDtypeStruct((G_h, 4, C, Np * W), jnp.float32),
        grid=(G_lane, G_h),
        in_specs=[
            pl.BlockSpec((1, C, Hs, LB), lambda g, h: (h, 0, 0, g)),
            pl.BlockSpec((1, Hs, LB), lambda g, h: (h, 0, g)),
        ],
        out_specs=pl.BlockSpec((1, 4, C, LB), lambda g, h: (h, 0, 0, g)),
        compiler_params=pltpu.CompilerParams(
            dimension_semantics=("parallel", "parallel"),
            vmem_limit_bytes=vmem_limit),
    )(pred_strips, gt_strips)

    # Tiny epilogue in plain JAX: combine strips, per-sample lane-group sums,
    # then P / R / BF1 / mean.
    sums = partials.sum(axis=0).reshape(4, C, Np, W).sum(axis=3)[:, :, :N]
    P = sums[0] / (sums[1] + EPS)
    R = sums[2] / (sums[3] + EPS)
    BF1 = 2.0 * P * R / (P + R + EPS)
    return jnp.mean(1.0 - BF1)


def boundary_loss_ref(pred, gt, theta0=3, theta=5):
    """Pure-JAX reference mirroring the PyTorch module."""
    N, C, H, W = pred.shape
    p = jax.nn.softmax(pred.astype(jnp.float32), axis=1)
    oh = jax.nn.one_hot(jnp.clip(gt, 0, C - 1), C, axis=1, dtype=jnp.float32)

    def mp(x, k):
        pad = (k - 1) // 2
        return lax.reduce_window(
            x, -jnp.inf, lax.max,
            window_dimensions=(1, 1, k, k),
            window_strides=(1, 1, 1, 1),
            padding=[(0, 0), (0, 0), (pad, pad), (pad, pad)])

    gt_b = mp(1.0 - oh, theta0) - (1.0 - oh)
    pred_b = mp(1.0 - p, theta0) - (1.0 - p)
    gt_b_ext = mp(gt_b, theta)
    pred_b_ext = mp(pred_b, theta)

    s = lambda x: jnp.sum(x, axis=(2, 3))
    P = s(pred_b * gt_b_ext) / (s(pred_b) + EPS)
    R = s(pred_b_ext * gt_b) / (s(gt_b) + EPS)
    BF1 = 2.0 * P * R / (P + R + EPS)
    return jnp.mean(1.0 - BF1)


def _check(pred, gt, theta0=3, theta=5, **kw):
    loss = jax.block_until_ready(boundary_loss(pred, gt, theta0, theta, **kw))
    ref = jax.block_until_ready(boundary_loss_ref(pred, gt, theta0, theta))
    # 1e-4 tolerance: the softmax denominator uses the EUP approximate
    # reciprocal (+ one Newton step); everything else is f32.
    np.testing.assert_allclose(np.asarray(loss), np.asarray(ref),
                               rtol=1e-4, atol=1e-4)


if __name__ == "__main__":
    key = jax.random.PRNGKey(0)
    k1, k2, k3, k4 = jax.random.split(key, 4)

    # Primary small-shape check (single grid step).
    N, C, H, W = 2, 4, 16, 16
    pred = jax.random.normal(k1, (N, C, H, W), dtype=jnp.float32)
    gt = jax.random.randint(k2, (N, H, W), 0, C, dtype=jnp.int32)
    _check(pred, gt, 3, 5)

    # Exercise the H-strip (halo) path: force 8-row strips -> G_h = 2.
    _check(pred, gt, 3, 5, _max_rows_per_strip=8)

    # Exercise multiple 128-lane blocks (G_lane = 2, LB = 128).
    N2 = 16
    pred2 = jax.random.normal(k3, (N2, C, H, W), dtype=jnp.float32)
    gt2 = jax.random.randint(k4, (N2, H, W), 0, C, dtype=jnp.int32)
    _check(pred2, gt2, 3, 5)

    print("KERNEL_OK")
</pallas_src>

<mosaic_0001>
module attributes {stable_mosaic.version = 11 : i64} {
  func.func @_boundary_partials_kernel(%arg0: i32, %arg1: i32, %arg2: memref<1x4x24x32xf32, #tpu.memory_space<vmem>>, %arg3: memref<1x24x32xi32, #tpu.memory_space<vmem>>, %arg4: memref<1x4x4x32xf32, #tpu.memory_space<vmem>>) attributes {dimension_semantics = [#tpu.dimension_semantics<parallel>, #tpu.dimension_semantics<parallel>], iteration_bounds = array<i64: 1, 1>, scalar_prefetch = 0 : i64, scratch_operands = 0 : i64, tpu.core_type = #tpu.core_type<tc>, window_params = [{transform_indices = @transform_0, window_bounds = array<i64: 1, 4, 24, 32>}, {transform_indices = @transform_1, window_bounds = array<i64: 1, 24, 32>}, {transform_indices = @transform_2, window_bounds = array<i64: 1, 4, 4, 32>}]} {
    %0 = tpu.iota {dimensions = array<i32: 1>} : vector<1x24x1xi32>
    %c16_i32 = arith.constant 16 : i32
    %1 = arith.muli %arg1, %c16_i32 : i32
    %c3_i32 = arith.constant 3 : i32
    %2 = arith.subi %1, %c3_i32 : i32
    %3 = vector.broadcast %2 : i32 to vector<1x24x1xi32>
    %4 = arith.addi %3, %0 : vector<1x24x1xi32>
    %c0_i32 = arith.constant 0 : i32
    %5 = vector.broadcast %c0_i32 : i32 to vector<1x24x1xi32>
    %6 = arith.cmpi sge, %4, %5 : vector<1x24x1xi32>
    %c16_i32_0 = arith.constant 16 : i32
    %7 = vector.broadcast %c16_i32_0 : i32 to vector<1x24x1xi32>
    %8 = arith.cmpi slt, %4, %7 : vector<1x24x1xi32>
    %9 = arith.andi %6, %8 : vector<1x24x1xi1>
    %c3_i32_1 = arith.constant 3 : i32
    %10 = vector.broadcast %c3_i32_1 : i32 to vector<1x24x1xi32>
    %11 = arith.cmpi sge, %0, %10 : vector<1x24x1xi32>
    %12 = arith.andi %9, %11 : vector<1x24x1xi1>
    %c19_i32 = arith.constant 19 : i32
    %13 = vector.broadcast %c19_i32 : i32 to vector<1x24x1xi32>
    %14 = arith.cmpi slt, %0, %13 : vector<1x24x1xi32>
    %15 = arith.andi %12, %14 : vector<1x24x1xi1>
    %16 = tpu.iota {dimensions = array<i32: 2>} : vector<1x1x32xi32>
    %c16_i32_2 = arith.constant 16 : i32
    %c0_i32_3 = arith.constant 0 : i32
    %17 = arith.cmpi eq, %c16_i32_2, %c0_i32_3 : i32
    %c1_i32 = arith.constant 1 : i32
    %18 = arith.select %17, %c1_i32, %c16_i32_2 : i32
    %19 = vector.broadcast %18 : i32 to vector<1x1x32xi32>
    %20 = arith.remsi %16, %19 : vector<1x1x32xi32>
    %c0_i32_4 = arith.constant 0 : i32
    %21 = vector.broadcast %c0_i32_4 : i32 to vector<1x1x32xi32>
    %22 = arith.cmpi ne, %20, %21 : vector<1x1x32xi32>
    %c0_i32_5 = arith.constant 0 : i32
    %23 = vector.broadcast %c0_i32_5 : i32 to vector<1x1x32xi32>
    %24 = arith.cmpi slt, %20, %23 : vector<1x1x32xi32>
    %c0_i32_6 = arith.constant 0 : i32
    %25 = arith.cmpi slt, %18, %c0_i32_6 : i32
    %26 = vector.broadcast %25 : i1 to vector<1x1x32xi1>
    %27 = vector.broadcast %26 : vector<1x1x32xi1> to vector<1x1x32xi1>
    %28 = arith.xori %24, %27 : vector<1x1x32xi1>
    %29 = arith.andi %28, %22 : vector<1x1x32xi1>
    %30 = vector.broadcast %18 : i32 to vector<1x1x32xi32>
    %31 = arith.addi %20, %30 : vector<1x1x32xi32>
    %32 = arith.select %29, %31, %20 : vector<1x1x32xi1>, vector<1x1x32xi32>
    %c-2_i32 = arith.constant -2 : i32
    %33 = vector.broadcast %c-2_i32 : i32 to vector<1x1x32xi32>
    %34 = arith.addi %32, %33 : vector<1x1x32xi32>
    %c0_i32_7 = arith.constant 0 : i32
    %35 = vector.broadcast %c0_i32_7 : i32 to vector<1x1x32xi32>
    %36 = arith.cmpi sge, %34, %35 : vector<1x1x32xi32>
    %c-2_i32_8 = arith.constant -2 : i32
    %37 = vector.broadcast %c-2_i32_8 : i32 to vector<1x1x32xi32>
    %38 = arith.addi %32, %37 : vector<1x1x32xi32>
    %c16_i32_9 = arith.constant 16 : i32
    %39 = vector.broadcast %c16_i32_9 : i32 to vector<1x1x32xi32>
    %40 = arith.cmpi slt, %38, %39 : vector<1x1x32xi32>
    %41 = arith.andi %36, %40 : vector<1x1x32xi1>
    %c-1_i32 = arith.constant -1 : i32
    %42 = vector.broadcast %c-1_i32 : i32 to vector<1x1x32xi32>
    %43 = arith.addi %32, %42 : vector<1x1x32xi32>
    %c0_i32_10 = arith.constant 0 : i32
    %44 = vector.broadcast %c0_i32_10 : i32 to vector<1x1x32xi32>
    %45 = arith.cmpi sge, %43, %44 : vector<1x1x32xi32>
    %c-1_i32_11 = arith.constant -1 : i32
    %46 = vector.broadcast %c-1_i32_11 : i32 to vector<1x1x32xi32>
    %47 = arith.addi %32, %46 : vector<1x1x32xi32>
    %c16_i32_12 = arith.constant 16 : i32
    %48 = vector.broadcast %c16_i32_12 : i32 to vector<1x1x32xi32>
    %49 = arith.cmpi slt, %47, %48 : vector<1x1x32xi32>
    %50 = arith.andi %45, %49 : vector<1x1x32xi1>
    %c1_i32_13 = arith.constant 1 : i32
    %51 = vector.broadcast %c1_i32_13 : i32 to vector<1x1x32xi32>
    %52 = arith.addi %32, %51 : vector<1x1x32xi32>
    %c0_i32_14 = arith.constant 0 : i32
    %53 = vector.broadcast %c0_i32_14 : i32 to vector<1x1x32xi32>
    %54 = arith.cmpi sge, %52, %53 : vector<1x1x32xi32>
    %c1_i32_15 = arith.constant 1 : i32
    %55 = vector.broadcast %c1_i32_15 : i32 to vector<1x1x32xi32>
    %56 = arith.addi %32, %55 : vector<1x1x32xi32>
    %c16_i32_16 = arith.constant 16 : i32
    %57 = vector.broadcast %c16_i32_16 : i32 to vector<1x1x32xi32>
    %58 = arith.cmpi slt, %56, %57 : vector<1x1x32xi32>
    %59 = arith.andi %54, %58 : vector<1x1x32xi1>
    %c2_i32 = arith.constant 2 : i32
    %60 = vector.broadcast %c2_i32 : i32 to vector<1x1x32xi32>
    %61 = arith.addi %32, %60 : vector<1x1x32xi32>
    %c0_i32_17 = arith.constant 0 : i32
    %62 = vector.broadcast %c0_i32_17 : i32 to vector<1x1x32xi32>
    %63 = arith.cmpi sge, %61, %62 : vector<1x1x32xi32>
    %c2_i32_18 = arith.constant 2 : i32
    %64 = vector.broadcast %c2_i32_18 : i32 to vector<1x1x32xi32>
    %65 = arith.addi %32, %64 : vector<1x1x32xi32>
    %c16_i32_19 = arith.constant 16 : i32
    %66 = vector.broadcast %c16_i32_19 : i32 to vector<1x1x32xi32>
    %67 = arith.cmpi slt, %65, %66 : vector<1x1x32xi32>
    %68 = arith.andi %63, %67 : vector<1x1x32xi1>
    %c0 = arith.constant 0 : index
    %c0_20 = arith.constant 0 : index
    %c0_21 = arith.constant 0 : index
    %c0_22 = arith.constant 0 : index
    %69 = vector.load %arg2[%c0, %c0_20, %c0_21, %c0_22] : memref<1x4x24x32xf32, #tpu.memory_space<vmem>>, vector<1x4x24x32xf32>
    %70 = vector.shape_cast %69 : vector<1x4x24x32xf32> to vector<4x24x32xf32>
    %cst = arith.constant dense<0xFF800000> : vector<24x32xf32>
    %71 = vector.multi_reduction <maximumf>, %70, %cst [0] : vector<4x24x32xf32> to vector<24x32xf32>
    %72 = vector.shape_cast %71 : vector<24x32xf32> to vector<1x24x32xf32>
    %73 = vector.broadcast %72 : vector<1x24x32xf32> to vector<4x24x32xf32>
    %74 = arith.subf %70, %73 : vector<4x24x32xf32>
    %75 = math.exp %74 : vector<4x24x32xf32>
    %cst_23 = arith.constant dense<0.000000e+00> : vector<24x32xf32>
    %76 = vector.multi_reduction <add>, %75, %cst_23 [0] : vector<4x24x32xf32> to vector<24x32xf32>
    %77 = vector.shape_cast %76 : vector<24x32xf32> to vector<1x24x32xf32>
    %78 = tpu.reciprocal %77 {approx = true} : vector<1x24x32xf32> -> vector<1x24x32xf32>
    %79 = arith.mulf %77, %78 : vector<1x24x32xf32>
    %cst_24 = arith.constant 2.000000e+00 : f32
    %80 = vector.broadcast %cst_24 : f32 to vector<1x24x32xf32>
    %81 = arith.subf %80, %79 : vector<1x24x32xf32>
    %82 = arith.mulf %78, %81 : vector<1x24x32xf32>
    %83 = vector.broadcast %82 : vector<1x24x32xf32> to vector<4x24x32xf32>
    %84 = arith.mulf %75, %83 : vector<4x24x32xf32>
    %c0_25 = arith.constant 0 : index
    %c0_26 = arith.constant 0 : index
    %c0_27 = arith.constant 0 : index
    %85 = vector.load %arg3[%c0_25, %c0_26, %c0_27] : memref<1x24x32xi32, #tpu.memory_space<vmem>>, vector<1x24x32xi32>
    %86 = vector.shape_cast %85 : vector<1x24x32xi32> to vector<24x32xi32>
    %c0_i32_28 = arith.constant 0 : i32
    %c3_i32_29 = arith.constant 3 : i32
    %87 = vector.broadcast %c0_i32_28 : i32 to vector<24x32xi32>
    %88 = arith.maxsi %87, %86 : vector<24x32xi32>
    %89 = vector.broadcast %c3_i32_29 : i32 to vector<24x32xi32>
    %90 = arith.minsi %89, %88 : vector<24x32xi32>
    %91 = tpu.iota {dimensions = array<i32: 0>} : vector<4x1x1xi32>
    %92 = vector.shape_cast %90 : vector<24x32xi32> to vector<1x24x32xi32>
    %93 = vector.broadcast %91 : vector<4x1x1xi32> to vector<4x24x32xi32>
    %94 = vector.broadcast %92 : vector<1x24x32xi32> to vector<4x24x32xi32>
    %95 = arith.cmpi eq, %93, %94 : vector<4x24x32xi32>
    %96 = arith.extui %95 : vector<4x24x32xi1> to vector<4x24x32xi32>
    %97 = arith.sitofp %96 : vector<4x24x32xi32> to vector<4x24x32xf32>
    %cst_30 = arith.constant 1.000000e+00 : f32
    %98 = vector.broadcast %cst_30 : f32 to vector<4x24x32xf32>
    %99 = arith.subf %98, %97 : vector<4x24x32xf32>
    %cst_31 = arith.constant 0.000000e+00 : f32
    %100 = vector.shape_cast %9 : vector<1x24x1xi1> to vector<1x24x1xi1>
    %101 = vector.broadcast %100 : vector<1x24x1xi1> to vector<4x24x32xi1>
    %102 = vector.broadcast %cst_31 : f32 to vector<4x24x32xf32>
    %103 = arith.select %101, %99, %102 : vector<4x24x32xi1>, vector<4x24x32xf32>
    %cst_32 = arith.constant 1.000000e+00 : f32
    %104 = vector.broadcast %cst_32 : f32 to vector<4x24x32xf32>
    %105 = arith.subf %104, %84 : vector<4x24x32xf32>
    %cst_33 = arith.constant 0.000000e+00 : f32
    %106 = vector.shape_cast %9 : vector<1x24x1xi1> to vector<1x24x1xi1>
    %107 = vector.broadcast %106 : vector<1x24x1xi1> to vector<4x24x32xi1>
    %108 = vector.broadcast %cst_33 : f32 to vector<4x24x32xf32>
    %109 = arith.select %107, %105, %108 : vector<4x24x32xi1>, vector<4x24x32xf32>
    %c1_i32_34 = arith.constant 1 : i32
    %110 = tpu.dynamic_rotate %103 by %c1_i32_34 dim 1 : vector<4x24x32xf32>, i32 -> vector<4x24x32xf32>
    %111 = arith.maximumf %103, %110 : vector<4x24x32xf32>
    %c23_i32 = arith.constant 23 : i32
    %112 = tpu.dynamic_rotate %103 by %c23_i32 dim 1 : vector<4x24x32xf32>, i32 -> vector<4x24x32xf32>
    %113 = arith.maximumf %111, %112 : vector<4x24x32xf32>
    %c1_i32_35 = arith.constant 1 : i32
    %114 = tpu.dynamic_rotate %113 by %c1_i32_35 dim 2 : vector<4x24x32xf32>, i32 -> vector<4x24x32xf32>
    %cst_36 = arith.constant 0.000000e+00 : f32
    %115 = vector.shape_cast %50 : vector<1x1x32xi1> to vector<1x1x32xi1>
    %116 = vector.broadcast %115 : vector<1x1x32xi1> to vector<4x24x32xi1>
    %117 = vector.broadcast %cst_36 : f32 to vector<4x24x32xf32>
    %118 = arith.select %116, %114, %117 : vector<4x24x32xi1>, vector<4x24x32xf32>
    %119 = arith.maximumf %113, %118 : vector<4x24x32xf32>
    %c31_i32 = arith.constant 31 : i32
    %120 = tpu.dynamic_rotate %113 by %c31_i32 dim 2 : vector<4x24x32xf32>, i32 -> vector<4x24x32xf32>
    %cst_37 = arith.constant 0.000000e+00 : f32
    %121 = vector.shape_cast %59 : vector<1x1x32xi1> to vector<1x1x32xi1>
    %122 = vector.broadcast %121 : vector<1x1x32xi1> to vector<4x24x32xi1>
    %123 = vector.broadcast %cst_37 : f32 to vector<4x24x32xf32>
    %124 = arith.select %122, %120, %123 : vector<4x24x32xi1>, vector<4x24x32xf32>
    %125 = arith.maximumf %119, %124 : vector<4x24x32xf32>
    %126 = arith.subf %125, %103 : vector<4x24x32xf32>
    %c1_i32_38 = arith.constant 1 : i32
    %127 = tpu.dynamic_rotate %109 by %c1_i32_38 dim 1 : vector<4x24x32xf32>, i32 -> vector<4x24x32xf32>
    %128 = arith.maximumf %109, %127 : vector<4x24x32xf32>
    %c23_i32_39 = arith.constant 23 : i32
    %129 = tpu.dynamic_rotate %109 by %c23_i32_39 dim 1 : vector<4x24x32xf32>, i32 -> vector<4x24x32xf32>
    %130 = arith.maximumf %128, %129 : vector<4x24x32xf32>
    %c1_i32_40 = arith.constant 1 : i32
    %131 = tpu.dynamic_rotate %130 by %c1_i32_40 dim 2 : vector<4x24x32xf32>, i32 -> vector<4x24x32xf32>
    %cst_41 = arith.constant 0.000000e+00 : f32
    %132 = vector.shape_cast %50 : vector<1x1x32xi1> to vector<1x1x32xi1>
    %133 = vector.broadcast %132 : vector<1x1x32xi1> to vector<4x24x32xi1>
    %134 = vector.broadcast %cst_41 : f32 to vector<4x24x32xf32>
    %135 = arith.select %133, %131, %134 : vector<4x24x32xi1>, vector<4x24x32xf32>
    %136 = arith.maximumf %130, %135 : vector<4x24x32xf32>
    %c31_i32_42 = arith.constant 31 : i32
    %137 = tpu.dynamic_rotate %130 by %c31_i32_42 dim 2 : vector<4x24x32xf32>, i32 -> vector<4x24x32xf32>
    %cst_43 = arith.constant 0.000000e+00 : f32
    %138 = vector.shape_cast %59 : vector<1x1x32xi1> to vector<1x1x32xi1>
    %139 = vector.broadcast %138 : vector<1x1x32xi1> to vector<4x24x32xi1>
    %140 = vector.broadcast %cst_43 : f32 to vector<4x24x32xf32>
    %141 = arith.select %139, %137, %140 : vector<4x24x32xi1>, vector<4x24x32xf32>
    %142 = arith.maximumf %136, %141 : vector<4x24x32xf32>
    %143 = arith.subf %142, %109 : vector<4x24x32xf32>
    %cst_44 = arith.constant 0.000000e+00 : f32
    %144 = vector.shape_cast %9 : vector<1x24x1xi1> to vector<1x24x1xi1>
    %145 = vector.broadcast %144 : vector<1x24x1xi1> to vector<4x24x32xi1>
    %146 = vector.broadcast %cst_44 : f32 to vector<4x24x32xf32>
    %147 = arith.select %145, %126, %146 : vector<4x24x32xi1>, vector<4x24x32xf32>
    %cst_45 = arith.constant 0.000000e+00 : f32
    %148 = vector.shape_cast %9 : vector<1x24x1xi1> to vector<1x24x1xi1>
    %149 = vector.broadcast %148 : vector<1x24x1xi1> to vector<4x24x32xi1>
    %150 = vector.broadcast %cst_45 : f32 to vector<4x24x32xf32>
    %151 = arith.select %149, %143, %150 : vector<4x24x32xi1>, vector<4x24x32xf32>
    %cst_46 = arith.constant 0.000000e+00 : f32
    %152 = vector.shape_cast %15 : vector<1x24x1xi1> to vector<1x24x1xi1>
    %153 = vector.broadcast %152 : vector<1x24x1xi1> to vector<4x24x32xi1>
    %154 = vector.broadcast %cst_46 : f32 to vector<4x24x32xf32>
    %155 = arith.select %153, %151, %154 : vector<4x24x32xi1>, vector<4x24x32xf32>
    %cst_47 = arith.constant 0.000000e+00 : f32
    %156 = vector.shape_cast %15 : vector<1x24x1xi1> to vector<1x24x1xi1>
    %157 = vector.broadcast %156 : vector<1x24x1xi1> to vector<4x24x32xi1>
    %158 = vector.broadcast %cst_47 : f32 to vector<4x24x32xf32>
    %159 = arith.select %157, %147, %158 : vector<4x24x32xi1>, vector<4x24x32xf32>
    %cst_48 = arith.constant dense<0.000000e+00> : vector<4x32xf32>
    %160 = vector.multi_reduction <add>, %155, %cst_48 [1] : vector<4x24x32xf32> to vector<4x32xf32>
    %c0_49 = arith.constant 0 : index
    %c1 = arith.constant 1 : index
    %c0_50 = arith.constant 0 : index
    %c0_51 = arith.constant 0 : index
    %161 = vector.load %arg4[%c0_49, %c1, %c0_50, %c0_51] : memref<1x4x4x32xf32, #tpu.memory_space<vmem>>, vector<1x1x4x32xf32>
    %162 = vector.shape_cast %161 : vector<1x1x4x32xf32> to vector<4x32xf32>
    %163 = vector.shape_cast %160 : vector<4x32xf32> to vector<1x1x4x32xf32>
    tpu.vector_store %arg4[%c0_49, %c1, %c0_50, %c0_51], %163 {strides = array<i32>} : memref<1x4x4x32xf32, #tpu.memory_space<vmem>>, vector<1x1x4x32xf32>,
    %cst_52 = arith.constant dense<0.000000e+00> : vector<4x32xf32>
    %164 = vector.multi_reduction <add>, %159, %cst_52 [1] : vector<4x24x32xf32> to vector<4x32xf32>
    %c0_53 = arith.constant 0 : index
    %c3 = arith.constant 3 : index
    %c0_54 = arith.constant 0 : index
    %c0_55 = arith.constant 0 : index
    %165 = vector.load %arg4[%c0_53, %c3, %c0_54, %c0_55] : memref<1x4x4x32xf32, #tpu.memory_space<vmem>>, vector<1x1x4x32xf32>
    %166 = vector.shape_cast %165 : vector<1x1x4x32xf32> to vector<4x32xf32>
    %167 = vector.shape_cast %164 : vector<4x32xf32> to vector<1x1x4x32xf32>
    tpu.vector_store %arg4[%c0_53, %c3, %c0_54, %c0_55], %167 {strides = array<i32>} : memref<1x4x4x32xf32, #tpu.memory_space<vmem>>, vector<1x1x4x32xf32>,
    %c2_i32_56 = arith.constant 2 : i32
    %168 = tpu.dynamic_rotate %147 by %c2_i32_56 dim 1 : vector<4x24x32xf32>, i32 -> vector<4x24x32xf32>
    %169 = arith.maximumf %147, %168 : vector<4x24x32xf32>
    %c1_i32_57 = arith.constant 1 : i32
    %170 = tpu.dynamic_rotate %147 by %c1_i32_57 dim 1 : vector<4x24x32xf32>, i32 -> vector<4x24x32xf32>
    %171 = arith.maximumf %169, %170 : vector<4x24x32xf32>
    %c23_i32_58 = arith.constant 23 : i32
    %172 = tpu.dynamic_rotate %147 by %c23_i32_58 dim 1 : vector<4x24x32xf32>, i32 -> vector<4x24x32xf32>
    %173 = arith.maximumf %171, %172 : vector<4x24x32xf32>
    %c22_i32 = arith.constant 22 : i32
    %174 = tpu.dynamic_rotate %147 by %c22_i32 dim 1 : vector<4x24x32xf32>, i32 -> vector<4x24x32xf32>
    %175 = arith.maximumf %173, %174 : vector<4x24x32xf32>
    %c2_i32_59 = arith.constant 2 : i32
    %176 = tpu.dynamic_rotate %175 by %c2_i32_59 dim 2 : vector<4x24x32xf32>, i32 -> vector<4x24x32xf32>
    %cst_60 = arith.constant 0.000000e+00 : f32
    %177 = vector.shape_cast %41 : vector<1x1x32xi1> to vector<1x1x32xi1>
    %178 = vector.broadcast %177 : vector<1x1x32xi1> to vector<4x24x32xi1>
    %179 = vector.broadcast %cst_60 : f32 to vector<4x24x32xf32>
    %180 = arith.select %178, %176, %179 : vector<4x24x32xi1>, vector<4x24x32xf32>
    %181 = arith.maximumf %175, %180 : vector<4x24x32xf32>
    %c1_i32_61 = arith.constant 1 : i32
    %182 = tpu.dynamic_rotate %175 by %c1_i32_61 dim 2 : vector<4x24x32xf32>, i32 -> vector<4x24x32xf32>
    %cst_62 = arith.constant 0.000000e+00 : f32
    %183 = vector.shape_cast %50 : vector<1x1x32xi1> to vector<1x1x32xi1>
    %184 = vector.broadcast %183 : vector<1x1x32xi1> to vector<4x24x32xi1>
    %185 = vector.broadcast %cst_62 : f32 to vector<4x24x32xf32>
    %186 = arith.select %184, %182, %185 : vector<4x24x32xi1>, vector<4x24x32xf32>
    %187 = arith.maximumf %181, %186 : vector<4x24x32xf32>
    %c31_i32_63 = arith.constant 31 : i32
    %188 = tpu.dynamic_rotate %175 by %c31_i32_63 dim 2 : vector<4x24x32xf32>, i32 -> vector<4x24x32xf32>
    %cst_64 = arith.constant 0.000000e+00 : f32
    %189 = vector.shape_cast %59 : vector<1x1x32xi1> to vector<1x1x32xi1>
    %190 = vector.broadcast %189 : vector<1x1x32xi1> to vector<4x24x32xi1>
    %191 = vector.broadcast %cst_64 : f32 to vector<4x24x32xf32>
    %192 = arith.select %190, %188, %191 : vector<4x24x32xi1>, vector<4x24x32xf32>
    %193 = arith.maximumf %187, %192 : vector<4x24x32xf32>
    %c30_i32 = arith.constant 30 : i32
    %194 = tpu.dynamic_rotate %175 by %c30_i32 dim 2 : vector<4x24x32xf32>, i32 -> vector<4x24x32xf32>
    %cst_65 = arith.constant 0.000000e+00 : f32
    %195 = vector.shape_cast %68 : vector<1x1x32xi1> to vector<1x1x32xi1>
    %196 = vector.broadcast %195 : vector<1x1x32xi1> to vector<4x24x32xi1>
    %197 = vector.broadcast %cst_65 : f32 to vector<4x24x32xf32>
    %198 = arith.select %196, %194, %197 : vector<4x24x32xi1>, vector<4x24x32xf32>
    %199 = arith.maximumf %193, %198 : vector<4x24x32xf32>
    %200 = arith.mulf %155, %199 : vector<4x24x32xf32>
    %cst_66 = arith.constant dense<0.000000e+00> : vector<4x32xf32>
    %201 = vector.multi_reduction <add>, %200, %cst_66 [1] : vector<4x24x32xf32> to vector<4x32xf32>
    %c0_67 = arith.constant 0 : index
    %c0_68 = arith.constant 0 : index
    %c0_69 = arith.constant 0 : index
    %c0_70 = arith.constant 0 : index
    %202 = vector.load %arg4[%c0_67, %c0_68, %c0_69, %c0_70] : memref<1x4x4x32xf32, #tpu.memory_space<vmem>>, vector<1x1x4x32xf32>
    %203 = vector.shape_cast %202 : vector<1x1x4x32xf32> to vector<4x32xf32>
    %204 = vector.shape_cast %201 : vector<4x32xf32> to vector<1x1x4x32xf32>
    tpu.vector_store %arg4[%c0_67, %c0_68, %c0_69, %c0_70], %204 {strides = array<i32>} : memref<1x4x4x32xf32, #tpu.memory_space<vmem>>, vector<1x1x4x32xf32>,
    %c2_i32_71 = arith.constant 2 : i32
    %205 = tpu.dynamic_rotate %151 by %c2_i32_71 dim 1 : vector<4x24x32xf32>, i32 -> vector<4x24x32xf32>
    %206 = arith.maximumf %151, %205 : vector<4x24x32xf32>
    %c1_i32_72 = arith.constant 1 : i32
    %207 = tpu.dynamic_rotate %151 by %c1_i32_72 dim 1 : vector<4x24x32xf32>, i32 -> vector<4x24x32xf32>
    %208 = arith.maximumf %206, %207 : vector<4x24x32xf32>
    %c23_i32_73 = arith.constant 23 : i32
    %209 = tpu.dynamic_rotate %151 by %c23_i32_73 dim 1 : vector<4x24x32xf32>, i32 -> vector<4x24x32xf32>
    %210 = arith.maximumf %208, %209 : vector<4x24x32xf32>
    %c22_i32_74 = arith.constant 22 : i32
    %211 = tpu.dynamic_rotate %151 by %c22_i32_74 dim 1 : vector<4x24x32xf32>, i32 -> vector<4x24x32xf32>
    %212 = arith.maximumf %210, %211 : vector<4x24x32xf32>
    %c2_i32_75 = arith.constant 2 : i32
    %213 = tpu.dynamic_rotate %212 by %c2_i32_75 dim 2 : vector<4x24x32xf32>, i32 -> vector<4x24x32xf32>
    %cst_76 = arith.constant 0.000000e+00 : f32
    %214 = vector.shape_cast %41 : vector<1x1x32xi1> to vector<1x1x32xi1>
    %215 = vector.broadcast %214 : vector<1x1x32xi1> to vector<4x24x32xi1>
    %216 = vector.broadcast %cst_76 : f32 to vector<4x24x32xf32>
    %217 = arith.select %215, %213, %216 : vector<4x24x32xi1>, vector<4x24x32xf32>
    %218 = arith.maximumf %212, %217 : vector<4x24x32xf32>
    %c1_i32_77 = arith.constant 1 : i32
    %219 = tpu.dynamic_rotate %212 by %c1_i32_77 dim 2 : vector<4x24x32xf32>, i32 -> vector<4x24x32xf32>
    %cst_78 = arith.constant 0.000000e+00 : f32
    %220 = vector.shape_cast %50 : vector<1x1x32xi1> to vector<1x1x32xi1>
    %221 = vector.broadcast %220 : vector<1x1x32xi1> to vector<4x24x32xi1>
    %222 = vector.broadcast %cst_78 : f32 to vector<4x24x32xf32>
    %223 = arith.select %221, %219, %222 : vector<4x24x32xi1>, vector<4x24x32xf32>
    %224 = arith.maximumf %218, %223 : vector<4x24x32xf32>
    %c31_i32_79 = arith.constant 31 : i32
    %225 = tpu.dynamic_rotate %212 by %c31_i32_79 dim 2 : vector<4x24x32xf32>, i32 -> vector<4x24x32xf32>
    %cst_80 = arith.constant 0.000000e+00 : f32
    %226 = vector.shape_cast %59 : vector<1x1x32xi1> to vector<1x1x32xi1>
    %227 = vector.broadcast %226 : vector<1x1x32xi1> to vector<4x24x32xi1>
    %228 = vector.broadcast %cst_80 : f32 to vector<4x24x32xf32>
    %229 = arith.select %227, %225, %228 : vector<4x24x32xi1>, vector<4x24x32xf32>
    %230 = arith.maximumf %224, %229 : vector<4x24x32xf32>
    %c30_i32_81 = arith.constant 30 : i32
    %231 = tpu.dynamic_rotate %212 by %c30_i32_81 dim 2 : vector<4x24x32xf32>, i32 -> vector<4x24x32xf32>
    %cst_82 = arith.constant 0.000000e+00 : f32
    %232 = vector.shape_cast %68 : vector<1x1x32xi1> to vector<1x1x32xi1>
    %233 = vector.broadcast %232 : vector<1x1x32xi1> to vector<4x24x32xi1>
    %234 = vector.broadcast %cst_82 : f32 to vector<4x24x32xf32>
    %235 = arith.select %233, %231, %234 : vector<4x24x32xi1>, vector<4x24x32xf32>
    %236 = arith.maximumf %230, %235 : vector<4x24x32xf32>
    %237 = arith.mulf %159, %236 : vector<4x24x32xf32>
    %cst_83 = arith.constant dense<0.000000e+00> : vector<4x32xf32>
    %238 = vector.multi_reduction <add>, %237, %cst_83 [1] : vector<4x24x32xf32> to vector<4x32xf32>
    %c0_84 = arith.constant 0 : index
    %c2 = arith.constant 2 : index
    %c0_85 = arith.constant 0 : index
    %c0_86 = arith.constant 0 : index
    %239 = vector.load %arg4[%c0_84, %c2, %c0_85, %c0_86] : memref<1x4x4x32xf32, #tpu.memory_space<vmem>>, vector<1x1x4x32xf32>
    %240 = vector.shape_cast %239 : vector<1x1x4x32xf32> to vector<4x32xf32>
    %241 = vector.shape_cast %238 : vector<4x32xf32> to vector<1x1x4x32xf32>
    tpu.vector_store %arg4[%c0_84, %c2, %c0_85, %c0_86], %241 {strides = array<i32>} : memref<1x4x4x32xf32, #tpu.memory_space<vmem>>, vector<1x1x4x32xf32>,
    return
  }
  func.func @transform_0(%arg0: i32, %arg1: i32) -> (i32, i32, i32, i32) {
    %c0_i32 = arith.constant 0 : i32
    %c0_i32_0 = arith.constant 0 : i32
    %c0_i32_1 = arith.constant 0 : i32
    return %arg1, %c0_i32, %c0_i32_0, %arg0 : i32, i32, i32, i32
  }
  func.func @transform_1(%arg0: i32, %arg1: i32) -> (i32, i32, i32) {
    %c0_i32 = arith.constant 0 : i32
    %c0_i32_0 = arith.constant 0 : i32
    return %arg1, %c0_i32, %arg0 : i32, i32, i32
  }
  func.func @transform_2(%arg0: i32, %arg1: i32) -> (i32, i32, i32, i32) {
    %c0_i32 = arith.constant 0 : i32
    %c0_i32_0 = arith.constant 0 : i32
    %c0_i32_1 = arith.constant 0 : i32
    return %arg1, %c0_i32, %c0_i32_0, %arg0 : i32, i32, i32, i32
  }
}

</mosaic_0001>

<llo_original>
// kernel: tpu_custom_call.1
$region0: #{tpu_custom_call.1}
  #allocation0 [shape = 'u32[]', space=smem, size = 0x4, offset = 0x4, fixed_abs, tag = 'smem constant byte address 0x4 - core index']
  #allocation1 [shape = 'u32[72,128]{1,0:T(1,128)}', space=vmem, size = 0x9000, scoped, tag = 'internal scratch']
  %s0 = inlined_call_operand.hbm [shape: f32[1,4,24,32], index: 0, kind: input, shape index: {}]
  %s1 = inlined_call_operand.hbm [shape: s32[1,24,32], index: 1, kind: input, shape index: {}]
  %s2 = inlined_call_operand.hbm [shape: f32[1,4,4,32], index: 2, kind: output, shape index: {}]
  %s3 = sld [smem:[#allocation0]]
  $region26: #{tpu_custom_call.1} parent=0
    _
  %s5 = ssub.s32 1, %s3
  %s6 = scalar_select 0, %s5, %s3
  $region1: #{tpu_custom_call.1} parent=0
    #allocation2 [shape = 'u8[49152]{0}', space=vmem, size = 0xc000, scoped, tag = 'input window, operand 0, single buffered']
    #allocation3 [shape = 's32[1]{0}', space=sflag, size = 0x4, scoped, tag = 'scoped memory for tpu_custom_call.1']
    #allocation4 [shape = 's32[1]{0}', space=sflag, size = 0x4, scoped, tag = 'scoped memory for tpu_custom_call.1']
    #allocation5 [shape = 'u8[12288]{0}', space=vmem, size = 0x3000, scoped, tag = 'input window, operand 1, single buffered']
    #allocation6 [shape = 's32[1]{0}', space=sflag, size = 0x4, scoped, tag = 'scoped memory for tpu_custom_call.1']
    #allocation7 [shape = 'u8[8192]{0}', space=vmem, size = 0x2000, scoped, tag = 'output window, operand 0, single buffered']
    %7 = vsyncpa [#allocation3], 0
    %8 = vsyncpa [#allocation6], 0
    %9 = vsyncpa [#allocation4], 0
    // Predicated region
    $region2: #{tpu_custom_call.1} parent=1 // pred_check
      _
    $region3: #{tpu_custom_call.1} parent=1 // pred_check_branch
      %11 = sbr.rel (0) target = $region5
    $region4: #{tpu_custom_call.1} parent=1 // pred_region
      %13 = vsyncadd [#allocation3], 0
      %s14 = sshll.u32 %s0, 4
      %s15 = int_to_ptr.hbm [resolvable:$true] %s14
      %s16 = sshll.u32 [#allocation2], 4
      %s17 = int_to_ptr.vmem [resolvable:$true] %s16
      %22 = dma.hbm_to_vmem [thread:$0]  %s15, 1536, %s17, [#allocation3], 128, 128, 8
    $region5: #{tpu_custom_call.1} parent=1 // pred_fallthru
      _
    // Predicated region
    $region6: #{tpu_custom_call.1} parent=1 // pred_check
      _
    $region7: #{tpu_custom_call.1} parent=1 // pred_check_branch
      %24 = sbr.rel (0) target = $region9
    $region8: #{tpu_custom_call.1} parent=1 // pred_region
      %26 = vsyncadd [#allocation6], 0
      %s27 = sshll.u32 %s1, 4
      %s28 = int_to_ptr.hbm [resolvable:$true] %s27
      %s29 = sshll.u32 [#allocation5], 4
      %s30 = int_to_ptr.vmem [resolvable:$true] %s29
      %35 = dma.hbm_to_vmem [thread:$0]  %s28, 384, %s30, [#allocation6], 128, 128, 8
    $region9: #{tpu_custom_call.1} parent=1 // pred_fallthru
      _
    // Predicated region
    $region10: #{tpu_custom_call.1} parent=1 // pred_check
      _
    $region11: #{tpu_custom_call.1} parent=1 // pred_check_branch
      %37 = sbr.rel (0) target = $region13
    $region12: #{tpu_custom_call.1} parent=1 // pred_region
      %39 = dma.done [#allocation3], 1536
    $region13: #{tpu_custom_call.1} parent=1 // pred_fallthru
      _
    // Predicated region
    $region14: #{tpu_custom_call.1} parent=1 // pred_check
      _
    $region15: #{tpu_custom_call.1} parent=1 // pred_check_branch
      %41 = sbr.rel (0) target = $region17
    $region16: #{tpu_custom_call.1} parent=1 // pred_region
      %43 = dma.done [#allocation6], 384
    $region17: #{tpu_custom_call.1} parent=1 // pred_fallthru
      _
    %v44 = vlaneseq
    %v45 = vshrl.u32 %v44, 7
    %v46 = vadd.s32 %v45, 8
    %v47 = vadd.s32 %v45, 16
    %s48 = smul.u32 0, 16
    %s49 = ssub.s32 %s48, 3
    %v50 = vstv %s49
    %v51 = vadd.s32 %v50, %v45
    %v52 = vadd.s32 %v50, %v46
    %v53 = vadd.s32 %v50, %v47
    %vm54 = vcmp.ge.s32.totalorder %v51, 0
    %vm55 = vcmp.ge.s32.totalorder %v52, 0
    %vm56 = vcmp.ge.s32.totalorder %v53, 0
    %vm57 = vcmp.lt.s32.totalorder %v51, 16
    %vm58 = vcmp.lt.s32.totalorder %v52, 16
    %vm59 = vcmp.lt.s32.totalorder %v53, 16
    %vm60 = vmand %vm54, %vm57
    %vm61 = vmand %vm55, %vm58
    %vm62 = vmand %vm56, %vm59
    %vm63 = vcmp.ge.s32.totalorder %v45, 3
    %vm64 = vcmp.ge.s32.totalorder %v46, 3
    %vm65 = vcmp.ge.s32.totalorder %v47, 3
    %vm66 = vmand %vm60, %vm63
    %vm67 = vmand %vm61, %vm64
    %vm68 = vmand %vm62, %vm65
    %vm69 = vcmp.lt.s32.totalorder %v45, 19
    %vm70 = vcmp.lt.s32.totalorder %v46, 19
    %vm71 = vcmp.lt.s32.totalorder %v47, 19
    %vm72 = vmand %vm66, %vm69
    %vm73 = vmand %vm67, %vm70
    %vm74 = vmand %vm68, %vm71
    %v75 = vlaneseq
    %v76 = vand.u32 %v75, 127
    %vm77 = vcmp.lt.s32.totalorder %v76, 0
    %v78 = vsub.s32 0, %v76
    %v79 = vsel %vm77, %v78, %v76
    %v80 = vshrl.u32 %v79, 4
    %v81 = vand.u32 %v79, 15
    %v82 = vsub.s32 0, %v81
    %v83 = vsel %vm77, %v82, %v81
    %vm84 = vcmp.ne.s32.totalorder %v83, 0
    %vm85 = vcmp.lt.s32.totalorder %v83, 0
    %vm86 = vmand %vm85, %vm84
    %v87 = vadd.s32 %v83, 16
    %v88 = vsel %vm86, %v87, %v83
    %v89 = vadd.s32 %v88, 4294967294
    %vm90 = vcmp.ge.s32.totalorder %v89, 0
    %vm91 = vcmp.lt.s32.totalorder %v89, 16
    %vm92 = vmand %vm90, %vm91
    %v93 = vadd.s32 %v88, 4294967295
    %vm94 = vcmp.ge.s32.totalorder %v93, 0
    %vm95 = vcmp.lt.s32.totalorder %v93, 16
    %vm96 = vmand %vm94, %vm95
    %v97 = vadd.s32 %v88, 1
    %vm98 = vcmp.ge.s32.totalorder %v97, 0
    %vm99 = vcmp.lt.s32.totalorder %v97, 16
    %vm100 = vmand %vm98, %vm99
    %v101 = vadd.s32 %v88, 2
    %vm102 = vcmp.ge.s32.totalorder %v101, 0
    %vm103 = vcmp.lt.s32.totalorder %v101, 16
    %vm104 = vmand %vm102, %vm103
    %v105 = vld [vmem:[#allocation2] sm:$0xff]
    %v106 = vld [vmem:[#allocation2 + $0x8] sm:$0xff]
    %v107 = vld [vmem:[#allocation2 + $0x10] sm:$0xff]
    %v108 = vld [vmem:[#allocation2 + $0x18] sm:$0xff]
    %v109 = vld [vmem:[#allocation2 + $0x20] sm:$0xff]
    %v110 = vld [vmem:[#allocation2 + $0x28] sm:$0xff]
    %v111 = vld [vmem:[#allocation2 + $0x30] sm:$0xff]
    %v112 = vld [vmem:[#allocation2 + $0x38] sm:$0xff]
    %v113 = vld [vmem:[#allocation2 + $0x40] sm:$0xff]
    %v114 = vld [vmem:[#allocation2 + $0x48] sm:$0xff]
    %v115 = vld [vmem:[#allocation2 + $0x50] sm:$0xff]
    %v116 = vld [vmem:[#allocation2 + $0x58] sm:$0xff]
    %vm117 = vcmask 261120
    %v118 = vsel %vm117, %v105, -inf
    %v119 = vsel %vm117, %v108, -inf
    %v120 = vsel %vm117, %v111, -inf
    %v121 = vmax.f32 %v118, %v120
    %v122 = vsel %vm117, %v114, -inf
    %v123 = vmax.f32 %v119, %v122
    %v124 = vmax.f32 %v121, %v123
    %v125 = vsel %vm117, %v106, -inf
    %v126 = vsel %vm117, %v109, -inf
    %v127 = vsel %vm117, %v112, -inf
    %v128 = vmax.f32 %v125, %v127
    %v129 = vsel %vm117, %v115, -inf
    %v130 = vmax.f32 %v126, %v129
    %v131 = vmax.f32 %v128, %v130
    %v132 = vsel %vm117, %v107, -inf
    %v133 = vsel %vm117, %v110, -inf
    %v134 = vsel %vm117, %v113, -inf
    %v135 = vmax.f32 %v132, %v134
    %v136 = vsel %vm117, %v116, -inf
    %v137 = vmax.f32 %v133, %v136
    %v138 = vmax.f32 %v135, %v137
    %v139 = vsub.f32 %v105, %v124
    %v140 = vsub.f32 %v106, %v131
    %v141 = vsub.f32 %v107, %v138
    %v142 = vsub.f32 %v108, %v124
    %v143 = vsub.f32 %v109, %v131
    %v144 = vsub.f32 %v110, %v138
    %v145 = vsub.f32 %v111, %v124
    %v146 = vsub.f32 %v112, %v131
    %v147 = vsub.f32 %v113, %v138
    %v148 = vsub.f32 %v114, %v124
    %v149 = vsub.f32 %v115, %v131
    %v150 = vsub.f32 %v116, %v138
    %v151 = vmul.f32 %v139, 1.442695
    %v152 = vpow.pop %v151
    %v153 = vmul.f32 %v140, 1.442695
    %v154 = vpow.pop %v153
    %v155 = vmul.f32 %v141, 1.442695
    %v156 = vpow.pop %v155
    %v157 = vmul.f32 %v142, 1.442695
    %v158 = vpow.pop %v157
    %v159 = vmul.f32 %v143, 1.442695
    %v160 = vpow.pop %v159
    %v161 = vmul.f32 %v144, 1.442695
    %v162 = vpow.pop %v161
    %v163 = vmul.f32 %v145, 1.442695
    %v164 = vpow.pop %v163
    %v165 = vmul.f32 %v146, 1.442695
    %v166 = vpow.pop %v165
    %v167 = vmul.f32 %v147, 1.442695
    %v168 = vpow.pop %v167
    %v169 = vmul.f32 %v148, 1.442695
    %v170 = vpow.pop %v169
    %v171 = vmul.f32 %v149, 1.442695
    %v172 = vpow.pop %v171
    %v173 = vmul.f32 %v150, 1.442695
    %v174 = vpow.pop %v173
    %v175 = vsel %vm117, %v152, 0.0
    %v176 = vsel %vm117, %v158, 0.0
    %v177 = vadd.f32 %v175, %v176
    %v178 = vsel %vm117, %v164, 0.0
    %v179 = vadd.f32 %v177, %v178
    %v180 = vsel %vm117, %v170, 0.0
    %v181 = vadd.f32 %v179, %v180
    %v182 = vsel %vm117, %v154, 0.0
    %v183 = vsel %vm117, %v160, 0.0
    %v184 = vadd.f32 %v182, %v183
    %v185 = vsel %vm117, %v166, 0.0
    %v186 = vadd.f32 %v184, %v185
    %v187 = vsel %vm117, %v172, 0.0
    %v188 = vadd.f32 %v186, %v187
    %v189 = vsel %vm117, %v156, 0.0
    %v190 = vsel %vm117, %v162, 0.0
    %v191 = vadd.f32 %v189, %v190
    %v192 = vsel %vm117, %v168, 0.0
    %v193 = vadd.f32 %v191, %v192
    %v194 = vsel %vm117, %v174, 0.0
    %v195 = vadd.f32 %v193, %v194
    %v196 = vrcp.pop %v181
    %v197 = vrcp.pop %v188
    %v198 = vrcp.pop %v195
    %v199 = vmul.f32 %v181, %v196
    %v200 = vmul.f32 %v188, %v197
    %v201 = vmul.f32 %v195, %v198
    %v202 = vsub.f32 2.0, %v199
    %v203 = vsub.f32 2.0, %v200
    %v204 = vsub.f32 2.0, %v201
    %v205 = vmul.f32 %v196, %v202
    %v206 = vmul.f32 %v197, %v203
    %v207 = vmul.f32 %v198, %v204
    %v208 = vmul.f32 %v152, %v205
    %v209 = vmul.f32 %v154, %v206
    %v210 = vmul.f32 %v156, %v207
    %v211 = vmul.f32 %v158, %v205
    %v212 = vmul.f32 %v160, %v206
    %v213 = vmul.f32 %v162, %v207
    %v214 = vmul.f32 %v164, %v205
    %v215 = vmul.f32 %v166, %v206
    %v216 = vmul.f32 %v168, %v207
    %v217 = vmul.f32 %v170, %v205
    %v218 = vmul.f32 %v172, %v206
    %v219 = vmul.f32 %v174, %v207
    %v220 = vld [vmem:[#allocation5] sm:$0xff]
    %v221 = vld [vmem:[#allocation5 + $0x8] sm:$0xff]
    %v222 = vld [vmem:[#allocation5 + $0x10] sm:$0xff]
    %vm223 = vcmp.gt.s32.totalorder %v220, 0
    %v224 = vsel %vm223, %v220, 0
    %vm225 = vcmp.gt.s32.totalorder %v221, 0
    %v226 = vsel %vm225, %v221, 0
    %vm227 = vcmp.gt.s32.totalorder %v222, 0
    %v228 = vsel %vm227, %v222, 0
    %vm229 = vcmp.lt.s32.totalorder %v224, 3
    %v230 = vsel %vm229, %v224, 3
    %vm231 = vcmp.lt.s32.totalorder %v226, 3
    %v232 = vsel %vm231, %v226, 3
    %vm233 = vcmp.lt.s32.totalorder %v228, 3
    %v234 = vsel %vm233, %v228, 3
    %vm235 = vcmp.eq.s32.totalorder %v230, 0
    %vm236 = vcmp.eq.s32.totalorder %v232, 0
    %vm237 = vcmp.eq.s32.totalorder %v234, 0
    %vm238 = vcmp.eq.s32.totalorder %v230, 1
    %vm239 = vcmp.eq.s32.totalorder %v232, 1
    %vm240 = vcmp.eq.s32.totalorder %v234, 1
    %vm241 = vcmp.eq.s32.totalorder %v230, 2
    %vm242 = vcmp.eq.s32.totalorder %v232, 2
    %vm243 = vcmp.eq.s32.totalorder %v234, 2
    %vm244 = vcmp.eq.s32.totalorder %v230, 3
    %vm245 = vcmp.eq.s32.totalorder %v232, 3
    %vm246 = vcmp.eq.s32.totalorder %v234, 3
    %v247 = vsel %vm235, 1, 0
    %v248 = vsel %vm236, 1, 0
    %v249 = vsel %vm237, 1, 0
    %v250 = vsel %vm238, 1, 0
    %v251 = vsel %vm239, 1, 0
    %v252 = vsel %vm240, 1, 0
    %v253 = vsel %vm241, 1, 0
    %v254 = vsel %vm242, 1, 0
    %v255 = vsel %vm243, 1, 0
    %v256 = vsel %vm244, 1, 0
    %v257 = vsel %vm245, 1, 0
    %v258 = vsel %vm246, 1, 0
    %v259 = vcvt.s32.f32 %v247
    %v260 = vcvt.s32.f32 %v248
    %v261 = vcvt.s32.f32 %v249
    %v262 = vcvt.s32.f32 %v250
    %v263 = vcvt.s32.f32 %v251
    %v264 = vcvt.s32.f32 %v252
    %v265 = vcvt.s32.f32 %v253
    %v266 = vcvt.s32.f32 %v254
    %v267 = vcvt.s32.f32 %v255
    %v268 = vcvt.s32.f32 %v256
    %v269 = vcvt.s32.f32 %v257
    %v270 = vcvt.s32.f32 %v258
    %v271 = vsub.f32 1.0, %v259
    %v272 = vsub.f32 1.0, %v260
    %v273 = vsub.f32 1.0, %v261
    %v274 = vsub.f32 1.0, %v262
    %v275 = vsub.f32 1.0, %v263
    %v276 = vsub.f32 1.0, %v264
    %v277 = vsub.f32 1.0, %v265
    %v278 = vsub.f32 1.0, %v266
    %v279 = vsub.f32 1.0, %v267
    %v280 = vsub.f32 1.0, %v268
    %v281 = vsub.f32 1.0, %v269
    %v282 = vsub.f32 1.0, %v270
    %v283 = vsel %vm60, 1, 0
    %v284 = vsel %vm61, 1, 0
    %v285 = vsel %vm62, 1, 0
    %vm286 = vcmp.eq.s32.totalorder %v283, 1
    %vm287 = vcmp.eq.s32.totalorder %v284, 1
    %vm288 = vcmp.eq.s32.totalorder %v285, 1
    %v289 = vsel %vm286, %v271, 0.0
    %v290 = vsel %vm287, %v272, 0.0
    %v291 = vsel %vm288, %v273, 0.0
    %v292 = vsel %vm286, %v274, 0.0
    %v293 = vsel %vm287, %v275, 0.0
    %v294 = vsel %vm288, %v276, 0.0
    %v295 = vsel %vm286, %v277, 0.0
    %v296 = vsel %vm287, %v278, 0.0
    %v297 = vsel %vm288, %v279, 0.0
    %v298 = vsel %vm286, %v280, 0.0
    %v299 = vsel %vm287, %v281, 0.0
    %v300 = vsel %vm288, %v282, 0.0
    %v301 = vsub.f32 1.0, %v208
    %v302 = vsub.f32 1.0, %v209
    %v303 = vsub.f32 1.0, %v210
    %v304 = vsub.f32 1.0, %v211
    %v305 = vsub.f32 1.0, %v212
    %v306 = vsub.f32 1.0, %v213
    %v307 = vsub.f32 1.0, %v214
    %v308 = vsub.f32 1.0, %v215
    %v309 = vsub.f32 1.0, %v216
    %v310 = vsub.f32 1.0, %v217
    %v311 = vsub.f32 1.0, %v218
    %v312 = vsub.f32 1.0, %v219
    %v313 = vsel %vm286, %v301, 0.0
    %v314 = vsel %vm287, %v302, 0.0
    %v315 = vsel %vm288, %v303, 0.0
    %v316 = vsel %vm286, %v304, 0.0
    %v317 = vsel %vm287, %v305, 0.0
    %v318 = vsel %vm288, %v306, 0.0
    %v319 = vsel %vm286, %v307, 0.0
    %v320 = vsel %vm287, %v308, 0.0
    %v321 = vsel %vm288, %v309, 0.0
    %v322 = vsel %vm286, %v310, 0.0
    %v323 = vsel %vm287, %v311, 0.0
    %v324 = vsel %vm288, %v312, 0.0
    %v325 = vrot.slane %v289, 7
    %v326 = vrot.slane %v292, 7
    %v327 = vrot.slane %v295, 7
    %v328 = vrot.slane %v298, 7
    %v329 = vrot.slane %v290, 7
    %v330 = vrot.slane %v293, 7
    %v331 = vrot.slane %v296, 7
    %v332 = vrot.slane %v299, 7
    %v333 = vrot.slane %v291, 7
    %v334 = vrot.slane %v294, 7
    %v335 = vrot.slane %v297, 7
    %v336 = vrot.slane %v300, 7
    %vm337 = vcmp.lt.s32.totalorder %v45, 1
    %v338 = vsel %vm337, %v329, %v333
    %v339 = vsel %vm337, %v330, %v334
    %v340 = vsel %vm337, %v331, %v335
    %v341 = vsel %vm337, %v332, %v336
    %v342 = vsel %vm337, %v325, %v329
    %v343 = vsel %vm337, %v326, %v330
    %v344 = vsel %vm337, %v327, %v331
    %v345 = vsel %vm337, %v328, %v332
    %v346 = vsel %vm337, %v333, %v325
    %v347 = vsel %vm337, %v334, %v326
    %v348 = vsel %vm337, %v335, %v327
    %v349 = vsel %vm337, %v336, %v328
    %v350 = vmax.f32 %v289, %v346
    %v351 = vmax.f32 %v290, %v342
    %v352 = vmax.f32 %v291, %v338
    %v353 = vmax.f32 %v292, %v347
    %v354 = vmax.f32 %v293, %v343
    %v355 = vmax.f32 %v294, %v339
    %v356 = vmax.f32 %v295, %v348
    %v357 = vmax.f32 %v296, %v344
    %v358 = vmax.f32 %v297, %v340
    %v359 = vmax.f32 %v298, %v349
    %v360 = vmax.f32 %v299, %v345
    %v361 = vmax.f32 %v300, %v341
    %v362 = vrot.slane %v289, 1
    %v363 = vrot.slane %v292, 1
    %v364 = vrot.slane %v295, 1
    %v365 = vrot.slane %v298, 1
    %v366 = vrot.slane %v290, 1
    %v367 = vrot.slane %v293, 1
    %v368 = vrot.slane %v296, 1
    %v369 = vrot.slane %v299, 1
    %v370 = vrot.slane %v291, 1
    %v371 = vrot.slane %v294, 1
    %v372 = vrot.slane %v297, 1
    %v373 = vrot.slane %v300, 1
    %vm374 = vcmp.lt.s32.totalorder %v45, 7
    %v375 = vsel %vm374, %v366, %v370
    %v376 = vsel %vm374, %v367, %v371
    %v377 = vsel %vm374, %v368, %v372
    %v378 = vsel %vm374, %v369, %v373
    %v379 = vsel %vm374, %v362, %v366
    %v380 = vsel %vm374, %v363, %v367
    %v381 = vsel %vm374, %v364, %v368
    %v382 = vsel %vm374, %v365, %v369
    %v383 = vsel %vm374, %v370, %v362
    %v384 = vsel %vm374, %v371, %v363
    %v385 = vsel %vm374, %v372, %v364
    %v386 = vsel %vm374, %v373, %v365
    %v387 = vmax.f32 %v350, %v379
    %v388 = vmax.f32 %v351, %v375
    %v389 = vmax.f32 %v352, %v383
    %v390 = vmax.f32 %v353, %v380
    %v391 = vmax.f32 %v354, %v376
    %v392 = vmax.f32 %v355, %v384
    %v393 = vmax.f32 %v356, %v381
    %v394 = vmax.f32 %v357, %v377
    %v395 = vmax.f32 %v358, %v385
    %v396 = vmax.f32 %v359, %v382
    %v397 = vmax.f32 %v360, %v378
    %v398 = vmax.f32 %v361, %v386
    %vm399 = vcmask 1047808
    %400 = vrot.lane.b32.xlu0 %v387, 32
    %v401 = vpop.permute.xlu0 %400
    %v402 = vsel %vm399, %v401, %v387
    %403 = vrot.lane.b32.xlu0 %v388, 32
    %v404 = vpop.permute.xlu0 %403
    %v405 = vsel %vm399, %v404, %v388
    %406 = vrot.lane.b32.xlu0 %v389, 32
    %v407 = vpop.permute.xlu0 %406
    %v408 = vsel %vm399, %v407, %v389
    %409 = vrot.lane.b32.xlu0 %v390, 32
    %v410 = vpop.permute.xlu0 %409
    %v411 = vsel %vm399, %v410, %v390
    %412 = vrot.lane.b32.xlu0 %v391, 32
    %v413 = vpop.permute.xlu0 %412
    %v414 = vsel %vm399, %v413, %v391
    %415 = vrot.lane.b32.xlu0 %v392, 32
    %v416 = vpop.permute.xlu0 %415
    %v417 = vsel %vm399, %v416, %v392
    %418 = vrot.lane.b32.xlu0 %v393, 32
    %v419 = vpop.permute.xlu0 %418
    %v420 = vsel %vm399, %v419, %v393
    %421 = vrot.lane.b32.xlu0 %v394, 32
    %v422 = vpop.permute.xlu0 %421
    %v423 = vsel %vm399, %v422, %v394
    %424 = vrot.lane.b32.xlu0 %v395, 32
    %v425 = vpop.permute.xlu0 %424
    %v426 = vsel %vm399, %v425, %v395
    %427 = vrot.lane.b32.xlu0 %v396, 32
    %v428 = vpop.permute.xlu0 %427
    %v429 = vsel %vm399, %v428, %v396
    %430 = vrot.lane.b32.xlu0 %v397, 32
    %v431 = vpop.permute.xlu0 %430
    %v432 = vsel %vm399, %v431, %v397
    %433 = vrot.lane.b32.xlu0 %v398, 32
    %v434 = vpop.permute.xlu0 %433
    %v435 = vsel %vm399, %v434, %v398
    %436 = vrot.lane.b32.xlu0 %v402, 32
    %v437 = vpop.permute.xlu0 %436
    %438 = vrot.lane.b32.xlu0 %v405, 32
    %v439 = vpop.permute.xlu0 %438
    %440 = vrot.lane.b32.xlu0 %v408, 32
    %v441 = vpop.permute.xlu0 %440
    %442 = vrot.lane.b32.xlu0 %v411, 32
    %v443 = vpop.permute.xlu0 %442
    %444 = vrot.lane.b32.xlu0 %v414, 32
    %v445 = vpop.permute.xlu0 %444
    %446 = vrot.lane.b32.xlu0 %v417, 32
    %v447 = vpop.permute.xlu0 %446
    %448 = vrot.lane.b32.xlu0 %v420, 32
    %v449 = vpop.permute.xlu0 %448
    %450 = vrot.lane.b32.xlu0 %v423, 32
    %v451 = vpop.permute.xlu0 %450
    %452 = vrot.lane.b32.xlu0 %v426, 32
    %v453 = vpop.permute.xlu0 %452
    %454 = vrot.lane.b32.xlu0 %v429, 32
    %v455 = vpop.permute.xlu0 %454
    %456 = vrot.lane.b32.xlu0 %v432, 32
    %v457 = vpop.permute.xlu0 %456
    %458 = vrot.lane.b32.xlu0 %v435, 32
    %v459 = vpop.permute.xlu0 %458
    %v460 = vsel %vm399, %v437, %v387
    %v461 = vsel %vm399, %v439, %v388
    %v462 = vsel %vm399, %v441, %v389
    %v463 = vsel %vm399, %v443, %v390
    %v464 = vsel %vm399, %v445, %v391
    %v465 = vsel %vm399, %v447, %v392
    %v466 = vsel %vm399, %v449, %v393
    %v467 = vsel %vm399, %v451, %v394
    %v468 = vsel %vm399, %v453, %v395
    %v469 = vsel %vm399, %v455, %v396
    %v470 = vsel %vm399, %v457, %v397
    %v471 = vsel %vm399, %v459, %v398
    %v472 = vsel %vm96, 1, 0
    %vm473 = vcmp.eq.s32.totalorder %v472, 1
    %486 = vrot.lane.b32.xlu0 %v460, 97
    %v487 = vpop.permute.xlu0 %486
    %488 = vrot.lane.b32.xlu0 %v461, 97
    %v489 = vpop.permute.xlu0 %488
    %490 = vrot.lane.b32.xlu0 %v462, 97
    %v491 = vpop.permute.xlu0 %490
    %492 = vrot.lane.b32.xlu0 %v463, 97
    %v493 = vpop.permute.xlu0 %492
    %494 = vrot.lane.b32.xlu0 %v464, 97
    %v495 = vpop.permute.xlu0 %494
    %496 = vrot.lane.b32.xlu0 %v465, 97
    %v497 = vpop.permute.xlu0 %496
    %498 = vrot.lane.b32.xlu0 %v466, 97
    %v499 = vpop.permute.xlu0 %498
    %500 = vrot.lane.b32.xlu0 %v467, 97
    %v501 = vpop.permute.xlu0 %500
    %502 = vrot.lane.b32.xlu0 %v468, 97
    %v503 = vpop.permute.xlu0 %502
    %504 = vrot.lane.b32.xlu0 %v469, 97
    %v505 = vpop.permute.xlu0 %504
    %506 = vrot.lane.b32.xlu0 %v470, 97
    %v507 = vpop.permute.xlu0 %506
    %508 = vrot.lane.b32.xlu0 %v471, 97
    %v509 = vpop.permute.xlu0 %508
    %v522 = vsel %vm473, %v487, 0.0
    %v523 = vsel %vm473, %v489, 0.0
    %v524 = vsel %vm473, %v491, 0.0
    %v525 = vsel %vm473, %v493, 0.0
    %v526 = vsel %vm473, %v495, 0.0
    %v527 = vsel %vm473, %v497, 0.0
    %v528 = vsel %vm473, %v499, 0.0
    %v529 = vsel %vm473, %v501, 0.0
    %v530 = vsel %vm473, %v503, 0.0
    %v531 = vsel %vm473, %v505, 0.0
    %v532 = vsel %vm473, %v507, 0.0
    %v533 = vsel %vm473, %v509, 0.0
    %v534 = vmax.f32 %v387, %v522
    %v535 = vmax.f32 %v388, %v523
    %v536 = vmax.f32 %v389, %v524
    %v537 = vmax.f32 %v390, %v525
    %v538 = vmax.f32 %v391, %v526
    %v539 = vmax.f32 %v392, %v527
    %v540 = vmax.f32 %v393, %v528
    %v541 = vmax.f32 %v394, %v529
    %v542 = vmax.f32 %v395, %v530
    %v543 = vmax.f32 %v396, %v531
    %v544 = vmax.f32 %v397, %v532
    %v545 = vmax.f32 %v398, %v533
    %v546 = vsel %vm100, 1, 0
    %vm547 = vcmp.eq.s32.totalorder %v546, 1
    %548 = vrot.lane.b32.xlu0 %v460, 127
    %v549 = vpop.permute.xlu0 %548
    %550 = vrot.lane.b32.xlu0 %v461, 127
    %v551 = vpop.permute.xlu0 %550
    %552 = vrot.lane.b32.xlu0 %v462, 127
    %v553 = vpop.permute.xlu0 %552
    %554 = vrot.lane.b32.xlu0 %v463, 127
    %v555 = vpop.permute.xlu0 %554
    %556 = vrot.lane.b32.xlu0 %v464, 127
    %v557 = vpop.permute.xlu0 %556
    %558 = vrot.lane.b32.xlu0 %v465, 127
    %v559 = vpop.permute.xlu0 %558
    %560 = vrot.lane.b32.xlu0 %v466, 127
    %v561 = vpop.permute.xlu0 %560
    %562 = vrot.lane.b32.xlu0 %v467, 127
    %v563 = vpop.permute.xlu0 %562
    %564 = vrot.lane.b32.xlu0 %v468, 127
    %v565 = vpop.permute.xlu0 %564
    %566 = vrot.lane.b32.xlu0 %v469, 127
    %v567 = vpop.permute.xlu0 %566
    %568 = vrot.lane.b32.xlu0 %v470, 127
    %v569 = vpop.permute.xlu0 %568
    %570 = vrot.lane.b32.xlu0 %v471, 127
    %v571 = vpop.permute.xlu0 %570
    %v584 = vsel %vm547, %v549, 0.0
    %v585 = vsel %vm547, %v551, 0.0
    %v586 = vsel %vm547, %v553, 0.0
    %v587 = vsel %vm547, %v555, 0.0
    %v588 = vsel %vm547, %v557, 0.0
    %v589 = vsel %vm547, %v559, 0.0
    %v590 = vsel %vm547, %v561, 0.0
    %v591 = vsel %vm547, %v563, 0.0
    %v592 = vsel %vm547, %v565, 0.0
    %v593 = vsel %vm547, %v567, 0.0
    %v594 = vsel %vm547, %v569, 0.0
    %v595 = vsel %vm547, %v571, 0.0
    %v596 = vmax.f32 %v534, %v584
    %v597 = vmax.f32 %v535, %v585
    %v598 = vmax.f32 %v536, %v586
    %v599 = vmax.f32 %v537, %v587
    %v600 = vmax.f32 %v538, %v588
    %v601 = vmax.f32 %v539, %v589
    %v602 = vmax.f32 %v540, %v590
    %v603 = vmax.f32 %v541, %v591
    %v604 = vmax.f32 %v542, %v592
    %v605 = vmax.f32 %v543, %v593
    %v606 = vmax.f32 %v544, %v594
    %v607 = vmax.f32 %v545, %v595
    %v608 = vsub.f32 %v596, %v289
    %v609 = vsub.f32 %v597, %v290
    %v610 = vsub.f32 %v598, %v291
    %v611 = vsub.f32 %v599, %v292
    %v612 = vsub.f32 %v600, %v293
    %v613 = vsub.f32 %v601, %v294
    %v614 = vsub.f32 %v602, %v295
    %v615 = vsub.f32 %v603, %v296
    %v616 = vsub.f32 %v604, %v297
    %v617 = vsub.f32 %v605, %v298
    %v618 = vsub.f32 %v606, %v299
    %v619 = vsub.f32 %v607, %v300
    %v620 = vrot.slane %v313, 7
    %v621 = vrot.slane %v316, 7
    %v622 = vrot.slane %v319, 7
    %v623 = vrot.slane %v322, 7
    %v624 = vrot.slane %v314, 7
    %v625 = vrot.slane %v317, 7
    %v626 = vrot.slane %v320, 7
    %v627 = vrot.slane %v323, 7
    %v628 = vrot.slane %v315, 7
    %v629 = vrot.slane %v318, 7
    %v630 = vrot.slane %v321, 7
    %v631 = vrot.slane %v324, 7
    %v632 = vsel %vm337, %v624, %v628
    %v633 = vsel %vm337, %v625, %v629
    %v634 = vsel %vm337, %v626, %v630
    %v635 = vsel %vm337, %v627, %v631
    %v636 = vsel %vm337, %v620, %v624
    %v637 = vsel %vm337, %v621, %v625
    %v638 = vsel %vm337, %v622, %v626
    %v639 = vsel %vm337, %v623, %v627
    %v640 = vsel %vm337, %v628, %v620
    %v641 = vsel %vm337, %v629, %v621
    %v642 = vsel %vm337, %v630, %v622
    %v643 = vsel %vm337, %v631, %v623
    %v644 = vmax.f32 %v313, %v640
    %v645 = vmax.f32 %v314, %v636
    %v646 = vmax.f32 %v315, %v632
    %v647 = vmax.f32 %v316, %v641
    %v648 = vmax.f32 %v317, %v637
    %v649 = vmax.f32 %v318, %v633
    %v650 = vmax.f32 %v319, %v642
    %v651 = vmax.f32 %v320, %v638
    %v652 = vmax.f32 %v321, %v634
    %v653 = vmax.f32 %v322, %v643
    %v654 = vmax.f32 %v323, %v639
    %v655 = vmax.f32 %v324, %v635
    %v656 = vrot.slane %v313, 1
    %v657 = vrot.slane %v316, 1
    %v658 = vrot.slane %v319, 1
    %v659 = vrot.slane %v322, 1
    %v660 = vrot.slane %v314, 1
    %v661 = vrot.slane %v317, 1
    %v662 = vrot.slane %v320, 1
    %v663 = vrot.slane %v323, 1
    %v664 = vrot.slane %v315, 1
    %v665 = vrot.slane %v318, 1
    %v666 = vrot.slane %v321, 1
    %v667 = vrot.slane %v324, 1
    %v668 = vsel %vm374, %v660, %v664
    %v669 = vsel %vm374, %v661, %v665
    %v670 = vsel %vm374, %v662, %v666
    %v671 = vsel %vm374, %v663, %v667
    %v672 = vsel %vm374, %v656, %v660
    %v673 = vsel %vm374, %v657, %v661
    %v674 = vsel %vm374, %v658, %v662
    %v675 = vsel %vm374, %v659, %v663
    %v676 = vsel %vm374, %v664, %v656
    %v677 = vsel %vm374, %v665, %v657
    %v678 = vsel %vm374, %v666, %v658
    %v679 = vsel %vm374, %v667, %v659
    %v680 = vmax.f32 %v644, %v672
    %v681 = vmax.f32 %v645, %v668
    %v682 = vmax.f32 %v646, %v676
    %v683 = vmax.f32 %v647, %v673
    %v684 = vmax.f32 %v648, %v669
    %v685 = vmax.f32 %v649, %v677
    %v686 = vmax.f32 %v650, %v674
    %v687 = vmax.f32 %v651, %v670
    %v688 = vmax.f32 %v652, %v678
    %v689 = vmax.f32 %v653, %v675
    %v690 = vmax.f32 %v654, %v671
    %v691 = vmax.f32 %v655, %v679
    %692 = vrot.lane.b32.xlu0 %v680, 32
    %v693 = vpop.permute.xlu0 %692
    %v694 = vsel %vm399, %v693, %v680
    %695 = vrot.lane.b32.xlu0 %v681, 32
    %v696 = vpop.permute.xlu0 %695
    %v697 = vsel %vm399, %v696, %v681
    %698 = vrot.lane.b32.xlu0 %v682, 32
    %v699 = vpop.permute.xlu0 %698
    %v700 = vsel %vm399, %v699, %v682
    %701 = vrot.lane.b32.xlu0 %v683, 32
    %v702 = vpop.permute.xlu0 %701
    %v703 = vsel %vm399, %v702, %v683
    %704 = vrot.lane.b32.xlu0 %v684, 32
    %v705 = vpop.permute.xlu0 %704
    %v706 = vsel %vm399, %v705, %v684
    %707 = vrot.lane.b32.xlu0 %v685, 32
    %v708 = vpop.permute.xlu0 %707
    %v709 = vsel %vm399, %v708, %v685
    %710 = vrot.lane.b32.xlu0 %v686, 32
    %v711 = vpop.permute.xlu0 %710
    %v712 = vsel %vm399, %v711, %v686
    %713 = vrot.lane.b32.xlu0 %v687, 32
    %v714 = vpop.permute.xlu0 %713
    %v715 = vsel %vm399, %v714, %v687
    %716 = vrot.lane.b32.xlu0 %v688, 32
    %v717 = vpop.permute.xlu0 %716
    %v718 = vsel %vm399, %v717, %v688
    %719 = vrot.lane.b32.xlu0 %v689, 32
    %v720 = vpop.permute.xlu0 %719
    %v721 = vsel %vm399, %v720, %v689
    %722 = vrot.lane.b32.xlu0 %v690, 32
    %v723 = vpop.permute.xlu0 %722
    %v724 = vsel %vm399, %v723, %v690
    %725 = vrot.lane.b32.xlu0 %v691, 32
    %v726 = vpop.permute.xlu0 %725
    %v727 = vsel %vm399, %v726, %v691
    %728 = vrot.lane.b32.xlu0 %v694, 32
    %v729 = vpop.permute.xlu0 %728
    %730 = vrot.lane.b32.xlu0 %v697, 32
    %v731 = vpop.permute.xlu0 %730
    %732 = vrot.lane.b32.xlu0 %v700, 32
    %v733 = vpop.permute.xlu0 %732
    %734 = vrot.lane.b32.xlu0 %v703, 32
    %v735 = vpop.permute.xlu0 %734
    %736 = vrot.lane.b32.xlu0 %v706, 32
    %v737 = vpop.permute.xlu0 %736
    %738 = vrot.lane.b32.xlu0 %v709, 32
    %v739 = vpop.permute.xlu0 %738
    %740 = vrot.lane.b32.xlu0 %v712, 32
    %v741 = vpop.permute.xlu0 %740
    %742 = vrot.lane.b32.xlu0 %v715, 32
    %v743 = vpop.permute.xlu0 %742
    %744 = vrot.lane.b32.xlu0 %v718, 32
    %v745 = vpop.permute.xlu0 %744
    %746 = vrot.lane.b32.xlu0 %v721, 32
    %v747 = vpop.permute.xlu0 %746
    %748 = vrot.lane.b32.xlu0 %v724, 32
    %v749 = vpop.permute.xlu0 %748
    %750 = vrot.lane.b32.xlu0 %v727, 32
    %v751 = vpop.permute.xlu0 %750
    %v752 = vsel %vm399, %v729, %v680
    %v753 = vsel %vm399, %v731, %v681
    %v754 = vsel %vm399, %v733, %v682
    %v755 = vsel %vm399, %v735, %v683
    %v756 = vsel %vm399, %v737, %v684
    %v757 = vsel %vm399, %v739, %v685
    %v758 = vsel %vm399, %v741, %v686
    %v759 = vsel %vm399, %v743, %v687
    %v760 = vsel %vm399, %v745, %v688
    %v761 = vsel %vm399, %v747, %v689
    %v762 = vsel %vm399, %v749, %v690
    %v763 = vsel %vm399, %v751, %v691
    %776 = vrot.lane.b32.xlu0 %v752, 97
    %v777 = vpop.permute.xlu0 %776
    %778 = vrot.lane.b32.xlu0 %v753, 97
    %v779 = vpop.permute.xlu0 %778
    %780 = vrot.lane.b32.xlu0 %v754, 97
    %v781 = vpop.permute.xlu0 %780
    %782 = vrot.lane.b32.xlu0 %v755, 97
    %v783 = vpop.permute.xlu0 %782
    %784 = vrot.lane.b32.xlu0 %v756, 97
    %v785 = vpop.permute.xlu0 %784
    %786 = vrot.lane.b32.xlu0 %v757, 97
    %v787 = vpop.permute.xlu0 %786
    %788 = vrot.lane.b32.xlu0 %v758, 97
    %v789 = vpop.permute.xlu0 %788
    %790 = vrot.lane.b32.xlu0 %v759, 97
    %v791 = vpop.permute.xlu0 %790
    %792 = vrot.lane.b32.xlu0 %v760, 97
    %v793 = vpop.permute.xlu0 %792
    %794 = vrot.lane.b32.xlu0 %v761, 97
    %v795 = vpop.permute.xlu0 %794
    %796 = vrot.lane.b32.xlu0 %v762, 97
    %v797 = vpop.permute.xlu0 %796
    %798 = vrot.lane.b32.xlu0 %v763, 97
    %v799 = vpop.permute.xlu0 %798
    %v812 = vsel %vm473, %v777, 0.0
    %v813 = vsel %vm473, %v779, 0.0
    %v814 = vsel %vm473, %v781, 0.0
    %v815 = vsel %vm473, %v783, 0.0
    %v816 = vsel %vm473, %v785, 0.0
    %v817 = vsel %vm473, %v787, 0.0
    %v818 = vsel %vm473, %v789, 0.0
    %v819 = vsel %vm473, %v791, 0.0
    %v820 = vsel %vm473, %v793, 0.0
    %v821 = vsel %vm473, %v795, 0.0
    %v822 = vsel %vm473, %v797, 0.0
    %v823 = vsel %vm473, %v799, 0.0
    %v824 = vmax.f32 %v680, %v812
    %v825 = vmax.f32 %v681, %v813
    %v826 = vmax.f32 %v682, %v814
    %v827 = vmax.f32 %v683, %v815
    %v828 = vmax.f32 %v684, %v816
    %v829 = vmax.f32 %v685, %v817
    %v830 = vmax.f32 %v686, %v818
    %v831 = vmax.f32 %v687, %v819
    %v832 = vmax.f32 %v688, %v820
    %v833 = vmax.f32 %v689, %v821
    %v834 = vmax.f32 %v690, %v822
    %v835 = vmax.f32 %v691, %v823
    %836 = vrot.lane.b32.xlu0 %v752, 127
    %v837 = vpop.permute.xlu0 %836
    %838 = vrot.lane.b32.xlu0 %v753, 127
    %v839 = vpop.permute.xlu0 %838
    %840 = vrot.lane.b32.xlu0 %v754, 127
    %v841 = vpop.permute.xlu0 %840
    %842 = vrot.lane.b32.xlu0 %v755, 127
    %v843 = vpop.permute.xlu0 %842
    %844 = vrot.lane.b32.xlu0 %v756, 127
    %v845 = vpop.permute.xlu0 %844
    %846 = vrot.lane.b32.xlu0 %v757, 127
    %v847 = vpop.permute.xlu0 %846
    %848 = vrot.lane.b32.xlu0 %v758, 127
    %v849 = vpop.permute.xlu0 %848
    %850 = vrot.lane.b32.xlu0 %v759, 127
    %v851 = vpop.permute.xlu0 %850
    %852 = vrot.lane.b32.xlu0 %v760, 127
    %v853 = vpop.permute.xlu0 %852
    %854 = vrot.lane.b32.xlu0 %v761, 127
    %v855 = vpop.permute.xlu0 %854
    %856 = vrot.lane.b32.xlu0 %v762, 127
    %v857 = vpop.permute.xlu0 %856
    %858 = vrot.lane.b32.xlu0 %v763, 127
    %v859 = vpop.permute.xlu0 %858
    %v872 = vsel %vm547, %v837, 0.0
    %v873 = vsel %vm547, %v839, 0.0
    %v874 = vsel %vm547, %v841, 0.0
    %v875 = vsel %vm547, %v843, 0.0
    %v876 = vsel %vm547, %v845, 0.0
    %v877 = vsel %vm547, %v847, 0.0
    %v878 = vsel %vm547, %v849, 0.0
    %v879 = vsel %vm547, %v851, 0.0
    %v880 = vsel %vm547, %v853, 0.0
    %v881 = vsel %vm547, %v855, 0.0
    %v882 = vsel %vm547, %v857, 0.0
    %v883 = vsel %vm547, %v859, 0.0
    %v884 = vmax.f32 %v824, %v872
    %v885 = vmax.f32 %v825, %v873
    %v886 = vmax.f32 %v826, %v874
    %v887 = vmax.f32 %v827, %v875
    %v888 = vmax.f32 %v828, %v876
    %v889 = vmax.f32 %v829, %v877
    %v890 = vmax.f32 %v830, %v878
    %v891 = vmax.f32 %v831, %v879
    %v892 = vmax.f32 %v832, %v880
    %v893 = vmax.f32 %v833, %v881
    %v894 = vmax.f32 %v834, %v882
    %v895 = vmax.f32 %v835, %v883
    %v896 = vsub.f32 %v884, %v313
    %v897 = vsub.f32 %v885, %v314
    %v898 = vsub.f32 %v886, %v315
    %v899 = vsub.f32 %v887, %v316
    %v900 = vsub.f32 %v888, %v317
    %v901 = vsub.f32 %v889, %v318
    %v902 = vsub.f32 %v890, %v319
    %v903 = vsub.f32 %v891, %v320
    %v904 = vsub.f32 %v892, %v321
    %v905 = vsub.f32 %v893, %v322
    %v906 = vsub.f32 %v894, %v323
    %v907 = vsub.f32 %v895, %v324
    %v908 = vsel %vm286, %v608, 0.0
    %v909 = vsel %vm287, %v609, 0.0
    %v910 = vsel %vm288, %v610, 0.0
    %v911 = vsel %vm286, %v611, 0.0
    %v912 = vsel %vm287, %v612, 0.0
    %v913 = vsel %vm288, %v613, 0.0
    %v914 = vsel %vm286, %v614, 0.0
    %v915 = vsel %vm287, %v615, 0.0
    %v916 = vsel %vm288, %v616, 0.0
    %v917 = vsel %vm286, %v617, 0.0
    %v918 = vsel %vm287, %v618, 0.0
    %v919 = vsel %vm288, %v619, 0.0
    %v920 = vsel %vm286, %v896, 0.0
    %v921 = vsel %vm287, %v897, 0.0
    %v922 = vsel %vm288, %v898, 0.0
    %v923 = vsel %vm286, %v899, 0.0
    %v924 = vsel %vm287, %v900, 0.0
    %v925 = vsel %vm288, %v901, 0.0
    %v926 = vsel %vm286, %v902, 0.0
    %v927 = vsel %vm287, %v903, 0.0
    %v928 = vsel %vm288, %v904, 0.0
    %v929 = vsel %vm286, %v905, 0.0
    %v930 = vsel %vm287, %v906, 0.0
    %v931 = vsel %vm288, %v907, 0.0
    %v932 = vsel %vm72, 1, 0
    %v933 = vsel %vm73, 1, 0
    %v934 = vsel %vm74, 1, 0
    %vm935 = vcmp.eq.s32.totalorder %v932, 1
    %vm936 = vcmp.eq.s32.totalorder %v933, 1
    %vm937 = vcmp.eq.s32.totalorder %v934, 1
    %v938 = vsel %vm935, %v920, 0.0
    %v939 = vsel %vm936, %v921, 0.0
    %v940 = vsel %vm937, %v922, 0.0
    %v941 = vsel %vm935, %v923, 0.0
    %v942 = vsel %vm936, %v924, 0.0
    %v943 = vsel %vm937, %v925, 0.0
    %v944 = vsel %vm935, %v926, 0.0
    %v945 = vsel %vm936, %v927, 0.0
    %v946 = vsel %vm937, %v928, 0.0
    %v947 = vsel %vm935, %v929, 0.0
    %v948 = vsel %vm936, %v930, 0.0
    %v949 = vsel %vm937, %v931, 0.0
    %v950 = vsel %vm935, %v908, 0.0
    %v951 = vsel %vm936, %v909, 0.0
    %v952 = vsel %vm937, %v910, 0.0
    %v953 = vsel %vm935, %v911, 0.0
    %v954 = vsel %vm936, %v912, 0.0
    %v955 = vsel %vm937, %v913, 0.0
    %v956 = vsel %vm935, %v914, 0.0
    %v957 = vsel %vm936, %v915, 0.0
    %v958 = vsel %vm937, %v916, 0.0
    %v959 = vsel %vm935, %v917, 0.0
    %v960 = vsel %vm936, %v918, 0.0
    %v961 = vsel %vm937, %v919, 0.0
    %v962 = vsel %vm117, %v938, 0.0
    %v963 = vsel %vm117, %v939, 0.0
    %v964 = vadd.f32 %v962, %v963
    %v965 = vsel %vm117, %v940, 0.0
    %v966 = vadd.f32 %v964, %v965
    %v967 = vrot.slane %v966, 4
    %v968 = vadd.f32 %v966, %v967
    %v969 = vrot.slane %v968, 2
    %v970 = vadd.f32 %v968, %v969
    %v971 = vrot.slane %v970, 1
    %v972 = vadd.f32 %v970, %v971
    %v973 = vsel %vm117, %v941, 0.0
    %v974 = vsel %vm117, %v942, 0.0
    %v975 = vadd.f32 %v973, %v974
    %v976 = vsel %vm117, %v943, 0.0
    %v977 = vadd.f32 %v975, %v976
    %v978 = vrot.slane %v977, 4
    %v979 = vadd.f32 %v977, %v978
    %v980 = vrot.slane %v979, 2
    %v981 = vadd.f32 %v979, %v980
    %v982 = vrot.slane %v981, 1
    %v983 = vadd.f32 %v981, %v982
    %v984 = vsel %vm117, %v944, 0.0
    %v985 = vsel %vm117, %v945, 0.0
    %v986 = vadd.f32 %v984, %v985
    %v987 = vsel %vm117, %v946, 0.0
    %v988 = vadd.f32 %v986, %v987
    %v989 = vrot.slane %v988, 4
    %v990 = vadd.f32 %v988, %v989
    %v991 = vrot.slane %v990, 2
    %v992 = vadd.f32 %v990, %v991
    %v993 = vrot.slane %v992, 1
    %v994 = vadd.f32 %v992, %v993
    %v995 = vsel %vm117, %v947, 0.0
    %v996 = vsel %vm117, %v948, 0.0
    %v997 = vadd.f32 %v995, %v996
    %v998 = vsel %vm117, %v949, 0.0
    %v999 = vadd.f32 %v997, %v998
    %v1000 = vrot.slane %v999, 4
    %v1001 = vadd.f32 %v999, %v1000
    %v1002 = vrot.slane %v1001, 2
    %v1003 = vadd.f32 %v1001, %v1002
    %v1004 = vrot.slane %v1003, 1
    %v1005 = vadd.f32 %v1003, %v1004
    %vm1010 = vcmask 1041409
    %v1011 = vsel %vm1010, %v983, %v972
    %vm1012 = vcmask 1042434
    %v1013 = vsel %vm1012, %v994, %v1011
    %vm1014 = vcmask 1043459
    %v1015 = vsel %vm1014, %v1005, %v1013
    %s1017 = scalar_lea.vmem [#allocation7], 4
    %vm1018 = vcmask 257024
    %1019 = vst.msk [vmem:[%s1017] sm:$0xf] %vm1018, %v1015
    %v1020 = vsel %vm117, %v950, 0.0
    %v1021 = vsel %vm117, %v951, 0.0
    %v1022 = vadd.f32 %v1020, %v1021
    %v1023 = vsel %vm117, %v952, 0.0
    %v1024 = vadd.f32 %v1022, %v1023
    %v1025 = vrot.slane %v1024, 4
    %v1026 = vadd.f32 %v1024, %v1025
    %v1027 = vrot.slane %v1026, 2
    %v1028 = vadd.f32 %v1026, %v1027
    %v1029 = vrot.slane %v1028, 1
    %v1030 = vadd.f32 %v1028, %v1029
    %v1031 = vsel %vm117, %v953, 0.0
    %v1032 = vsel %vm117, %v954, 0.0
    %v1033 = vadd.f32 %v1031, %v1032
    %v1034 = vsel %vm117, %v955, 0.0
    %v1035 = vadd.f32 %v1033, %v1034
    %v1036 = vrot.slane %v1035, 4
    %v1037 = vadd.f32 %v1035, %v1036
    %v1038 = vrot.slane %v1037, 2
    %v1039 = vadd.f32 %v1037, %v1038
    %v1040 = vrot.slane %v1039, 1
    %v1041 = vadd.f32 %v1039, %v1040
    %v1042 = vsel %vm117, %v956, 0.0
    %v1043 = vsel %vm117, %v957, 0.0
    %v1044 = vadd.f32 %v1042, %v1043
    %v1045 = vsel %vm117, %v958, 0.0
    %v1046 = vadd.f32 %v1044, %v1045
    %v1047 = vrot.slane %v1046, 4
    %v1048 = vadd.f32 %v1046, %v1047
    %v1049 = vrot.slane %v1048, 2
    %v1050 = vadd.f32 %v1048, %v1049
    %v1051 = vrot.slane %v1050, 1
    %v1052 = vadd.f32 %v1050, %v1051
    %v1053 = vsel %vm117, %v959, 0.0
    %v1054 = vsel %vm117, %v960, 0.0
    %v1055 = vadd.f32 %v1053, %v1054
    %v1056 = vsel %vm117, %v961, 0.0
    %v1057 = vadd.f32 %v1055, %v1056
    %v1058 = vrot.slane %v1057, 4
    %v1059 = vadd.f32 %v1057, %v1058
    %v1060 = vrot.slane %v1059, 2
    %v1061 = vadd.f32 %v1059, %v1060
    %v1062 = vrot.slane %v1061, 1
    %v1063 = vadd.f32 %v1061, %v1062
    %v1068 = vsel %vm1010, %v1041, %v1030
    %v1069 = vsel %vm1012, %v1052, %v1068
    %v1070 = vsel %vm1014, %v1063, %v1069
    %s1072 = scalar_lea.vmem [#allocation7], 12
    %1073 = vst.msk [vmem:[%s1072] sm:$0xf] %vm1018, %v1070
    %v1074 = vrot.slane %v908, 6
    %v1075 = vrot.slane %v911, 6
    %v1076 = vrot.slane %v914, 6
    %v1077 = vrot.slane %v917, 6
    %v1078 = vrot.slane %v909, 6
    %v1079 = vrot.slane %v912, 6
    %v1080 = vrot.slane %v915, 6
    %v1081 = vrot.slane %v918, 6
    %v1082 = vrot.slane %v910, 6
    %v1083 = vrot.slane %v913, 6
    %v1084 = vrot.slane %v916, 6
    %v1085 = vrot.slane %v919, 6
    %vm1086 = vcmp.lt.s32.totalorder %v45, 2
    %v1087 = vsel %vm1086, %v1078, %v1082
    %v1088 = vsel %vm1086, %v1079, %v1083
    %v1089 = vsel %vm1086, %v1080, %v1084
    %v1090 = vsel %vm1086, %v1081, %v1085
    %v1091 = vsel %vm1086, %v1074, %v1078
    %v1092 = vsel %vm1086, %v1075, %v1079
    %v1093 = vsel %vm1086, %v1076, %v1080
    %v1094 = vsel %vm1086, %v1077, %v1081
    %v1095 = vsel %vm1086, %v1082, %v1074
    %v1096 = vsel %vm1086, %v1083, %v1075
    %v1097 = vsel %vm1086, %v1084, %v1076
    %v1098 = vsel %vm1086, %v1085, %v1077
    %v1099 = vmax.f32 %v908, %v1095
    %v1100 = vmax.f32 %v909, %v1091
    %v1101 = vmax.f32 %v910, %v1087
    %v1102 = vmax.f32 %v911, %v1096
    %v1103 = vmax.f32 %v912, %v1092
    %v1104 = vmax.f32 %v913, %v1088
    %v1105 = vmax.f32 %v914, %v1097
    %v1106 = vmax.f32 %v915, %v1093
    %v1107 = vmax.f32 %v916, %v1089
    %v1108 = vmax.f32 %v917, %v1098
    %v1109 = vmax.f32 %v918, %v1094
    %v1110 = vmax.f32 %v919, %v1090
    %v1111 = vrot.slane %v908, 7
    %v1112 = vrot.slane %v911, 7
    %v1113 = vrot.slane %v914, 7
    %v1114 = vrot.slane %v917, 7
    %v1115 = vrot.slane %v909, 7
    %v1116 = vrot.slane %v912, 7
    %v1117 = vrot.slane %v915, 7
    %v1118 = vrot.slane %v918, 7
    %v1119 = vrot.slane %v910, 7
    %v1120 = vrot.slane %v913, 7
    %v1121 = vrot.slane %v916, 7
    %v1122 = vrot.slane %v919, 7
    %v1123 = vsel %vm337, %v1115, %v1119
    %v1124 = vsel %vm337, %v1116, %v1120
    %v1125 = vsel %vm337, %v1117, %v1121
    %v1126 = vsel %vm337, %v1118, %v1122
    %v1127 = vsel %vm337, %v1111, %v1115
    %v1128 = vsel %vm337, %v1112, %v1116
    %v1129 = vsel %vm337, %v1113, %v1117
    %v1130 = vsel %vm337, %v1114, %v1118
    %v1131 = vsel %vm337, %v1119, %v1111
    %v1132 = vsel %vm337, %v1120, %v1112
    %v1133 = vsel %vm337, %v1121, %v1113
    %v1134 = vsel %vm337, %v1122, %v1114
    %v1135 = vmax.f32 %v1099, %v1131
    %v1136 = vmax.f32 %v1100, %v1127
    %v1137 = vmax.f32 %v1101, %v1123
    %v1138 = vmax.f32 %v1102, %v1132
    %v1139 = vmax.f32 %v1103, %v1128
    %v1140 = vmax.f32 %v1104, %v1124
    %v1141 = vmax.f32 %v1105, %v1133
    %v1142 = vmax.f32 %v1106, %v1129
    %v1143 = vmax.f32 %v1107, %v1125
    %v1144 = vmax.f32 %v1108, %v1134
    %v1145 = vmax.f32 %v1109, %v1130
    %v1146 = vmax.f32 %v1110, %v1126
    %v1147 = vrot.slane %v908, 1
    %v1148 = vrot.slane %v911, 1
    %v1149 = vrot.slane %v914, 1
    %v1150 = vrot.slane %v917, 1
    %v1151 = vrot.slane %v909, 1
    %v1152 = vrot.slane %v912, 1
    %v1153 = vrot.slane %v915, 1
    %v1154 = vrot.slane %v918, 1
    %v1155 = vrot.slane %v910, 1
    %v1156 = vrot.slane %v913, 1
    %v1157 = vrot.slane %v916, 1
    %v1158 = vrot.slane %v919, 1
    %v1159 = vsel %vm374, %v1151, %v1155
    %v1160 = vsel %vm374, %v1152, %v1156
    %v1161 = vsel %vm374, %v1153, %v1157
    %v1162 = vsel %vm374, %v1154, %v1158
    %v1163 = vsel %vm374, %v1147, %v1151
    %v1164 = vsel %vm374, %v1148, %v1152
    %v1165 = vsel %vm374, %v1149, %v1153
    %v1166 = vsel %vm374, %v1150, %v1154
    %v1167 = vsel %vm374, %v1155, %v1147
    %v1168 = vsel %vm374, %v1156, %v1148
    %v1169 = vsel %vm374, %v1157, %v1149
    %v1170 = vsel %vm374, %v1158, %v1150
    %v1171 = vmax.f32 %v1135, %v1163
    %v1172 = vmax.f32 %v1136, %v1159
    %v1173 = vmax.f32 %v1137, %v1167
    %v1174 = vmax.f32 %v1138, %v1164
    %v1175 = vmax.f32 %v1139, %v1160
    %v1176 = vmax.f32 %v1140, %v1168
    %v1177 = vmax.f32 %v1141, %v1165
    %v1178 = vmax.f32 %v1142, %v1161
    %v1179 = vmax.f32 %v1143, %v1169
    %v1180 = vmax.f32 %v1144, %v1166
    %v1181 = vmax.f32 %v1145, %v1162
    %v1182 = vmax.f32 %v1146, %v1170
    %v1183 = vrot.slane %v908, 2
    %v1184 = vrot.slane %v911, 2
    %v1185 = vrot.slane %v914, 2
    %v1186 = vrot.slane %v917, 2
    %v1187 = vrot.slane %v909, 2
    %v1188 = vrot.slane %v912, 2
    %v1189 = vrot.slane %v915, 2
    %v1190 = vrot.slane %v918, 2
    %v1191 = vrot.slane %v910, 2
    %v1192 = vrot.slane %v913, 2
    %v1193 = vrot.slane %v916, 2
    %v1194 = vrot.slane %v919, 2
    %vm1195 = vcmp.lt.s32.totalorder %v45, 6
    %v1196 = vsel %vm1195, %v1187, %v1191
    %v1197 = vsel %vm1195, %v1188, %v1192
    %v1198 = vsel %vm1195, %v1189, %v1193
    %v1199 = vsel %vm1195, %v1190, %v1194
    %v1200 = vsel %vm1195, %v1183, %v1187
    %v1201 = vsel %vm1195, %v1184, %v1188
    %v1202 = vsel %vm1195, %v1185, %v1189
    %v1203 = vsel %vm1195, %v1186, %v1190
    %v1204 = vsel %vm1195, %v1191, %v1183
    %v1205 = vsel %vm1195, %v1192, %v1184
    %v1206 = vsel %vm1195, %v1193, %v1185
    %v1207 = vsel %vm1195, %v1194, %v1186
    %v1208 = vmax.f32 %v1171, %v1200
    %v1209 = vmax.f32 %v1172, %v1196
    %v1210 = vmax.f32 %v1173, %v1204
    %v1211 = vmax.f32 %v1174, %v1201
    %v1212 = vmax.f32 %v1175, %v1197
    %v1213 = vmax.f32 %v1176, %v1205
    %v1214 = vmax.f32 %v1177, %v1202
    %v1215 = vmax.f32 %v1178, %v1198
    %v1216 = vmax.f32 %v1179, %v1206
    %v1217 = vmax.f32 %v1180, %v1203
    %v1218 = vmax.f32 %v1181, %v1199
    %v1219 = vmax.f32 %v1182, %v1207
    %1220 = vrot.lane.b32.xlu0 %v1208, 32
    %v1221 = vpop.permute.xlu0 %1220
    %v1222 = vsel %vm399, %v1221, %v1208
    %1223 = vrot.lane.b32.xlu0 %v1209, 32
    %v1224 = vpop.permute.xlu0 %1223
    %v1225 = vsel %vm399, %v1224, %v1209
    %1226 = vrot.lane.b32.xlu0 %v1210, 32
    %v1227 = vpop.permute.xlu0 %1226
    %v1228 = vsel %vm399, %v1227, %v1210
    %1229 = vrot.lane.b32.xlu0 %v1211, 32
    %v1230 = vpop.permute.xlu0 %1229
    %v1231 = vsel %vm399, %v1230, %v1211
    %1232 = vrot.lane.b32.xlu0 %v1212, 32
    %v1233 = vpop.permute.xlu0 %1232
    %v1234 = vsel %vm399, %v1233, %v1212
    %1235 = vrot.lane.b32.xlu0 %v1213, 32
    %v1236 = vpop.permute.xlu0 %1235
    %v1237 = vsel %vm399, %v1236, %v1213
    %1238 = vrot.lane.b32.xlu0 %v1214, 32
    %v1239 = vpop.permute.xlu0 %1238
    %v1240 = vsel %vm399, %v1239, %v1214
    %1241 = vrot.lane.b32.xlu0 %v1215, 32
    %v1242 = vpop.permute.xlu0 %1241
    %v1243 = vsel %vm399, %v1242, %v1215
    %1244 = vrot.lane.b32.xlu0 %v1216, 32
    %v1245 = vpop.permute.xlu0 %1244
    %v1246 = vsel %vm399, %v1245, %v1216
    %1247 = vrot.lane.b32.xlu0 %v1217, 32
    %v1248 = vpop.permute.xlu0 %1247
    %v1249 = vsel %vm399, %v1248, %v1217
    %1250 = vrot.lane.b32.xlu0 %v1218, 32
    %v1251 = vpop.permute.xlu0 %1250
    %v1252 = vsel %vm399, %v1251, %v1218
    %1253 = vrot.lane.b32.xlu0 %v1219, 32
    %v1254 = vpop.permute.xlu0 %1253
    %v1255 = vsel %vm399, %v1254, %v1219
    %1256 = vrot.lane.b32.xlu0 %v1222, 32
    %v1257 = vpop.permute.xlu0 %1256
    %1258 = vrot.lane.b32.xlu0 %v1225, 32
    %v1259 = vpop.permute.xlu0 %1258
    %1260 = vrot.lane.b32.xlu0 %v1228, 32
    %v1261 = vpop.permute.xlu0 %1260
    %1262 = vrot.lane.b32.xlu0 %v1231, 32
    %v1263 = vpop.permute.xlu0 %1262
    %1264 = vrot.lane.b32.xlu0 %v1234, 32
    %v1265 = vpop.permute.xlu0 %1264
    %1266 = vrot.lane.b32.xlu0 %v1237, 32
    %v1267 = vpop.permute.xlu0 %1266
    %1268 = vrot.lane.b32.xlu0 %v1240, 32
    %v1269 = vpop.permute.xlu0 %1268
    %1270 = vrot.lane.b32.xlu0 %v1243, 32
    %v1271 = vpop.permute.xlu0 %1270
    %1272 = vrot.lane.b32.xlu0 %v1246, 32
    %v1273 = vpop.permute.xlu0 %1272
    %1274 = vrot.lane.b32.xlu0 %v1249, 32
    %v1275 = vpop.permute.xlu0 %1274
    %1276 = vrot.lane.b32.xlu0 %v1252, 32
    %v1277 = vpop.permute.xlu0 %1276
    %1278 = vrot.lane.b32.xlu0 %v1255, 32
    %v1279 = vpop.permute.xlu0 %1278
    %v1280 = vsel %vm399, %v1257, %v1208
    %v1281 = vsel %vm399, %v1259, %v1209
    %v1282 = vsel %vm399, %v1261, %v1210
    %v1283 = vsel %vm399, %v1263, %v1211
    %v1284 = vsel %vm399, %v1265, %v1212
    %v1285 = vsel %vm399, %v1267, %v1213
    %v1286 = vsel %vm399, %v1269, %v1214
    %v1287 = vsel %vm399, %v1271, %v1215
    %v1288 = vsel %vm399, %v1273, %v1216
    %v1289 = vsel %vm399, %v1275, %v1217
    %v1290 = vsel %vm399, %v1277, %v1218
    %v1291 = vsel %vm399, %v1279, %v1219
    %v1292 = vsel %vm92, 1, 0
    %vm1293 = vcmp.eq.s32.totalorder %v1292, 1
    %1306 = vrot.lane.b32.xlu0 %v1280, 98
    %v1307 = vpop.permute.xlu0 %1306
    %1308 = vrot.lane.b32.xlu0 %v1281, 98
    %v1309 = vpop.permute.xlu0 %1308
    %1310 = vrot.lane.b32.xlu0 %v1282, 98
    %v1311 = vpop.permute.xlu0 %1310
    %1312 = vrot.lane.b32.xlu0 %v1283, 98
    %v1313 = vpop.permute.xlu0 %1312
    %1314 = vrot.lane.b32.xlu0 %v1284, 98
    %v1315 = vpop.permute.xlu0 %1314
    %1316 = vrot.lane.b32.xlu0 %v1285, 98
    %v1317 = vpop.permute.xlu0 %1316
    %1318 = vrot.lane.b32.xlu0 %v1286, 98
    %v1319 = vpop.permute.xlu0 %1318
    %1320 = vrot.lane.b32.xlu0 %v1287, 98
    %v1321 = vpop.permute.xlu0 %1320
    %1322 = vrot.lane.b32.xlu0 %v1288, 98
    %v1323 = vpop.permute.xlu0 %1322
    %1324 = vrot.lane.b32.xlu0 %v1289, 98
    %v1325 = vpop.permute.xlu0 %1324
    %1326 = vrot.lane.b32.xlu0 %v1290, 98
    %v1327 = vpop.permute.xlu0 %1326
    %1328 = vrot.lane.b32.xlu0 %v1291, 98
    %v1329 = vpop.permute.xlu0 %1328
    %v1342 = vsel %vm1293, %v1307, 0.0
    %v1343 = vsel %vm1293, %v1309, 0.0
    %v1344 = vsel %vm1293, %v1311, 0.0
    %v1345 = vsel %vm1293, %v1313, 0.0
    %v1346 = vsel %vm1293, %v1315, 0.0
    %v1347 = vsel %vm1293, %v1317, 0.0
    %v1348 = vsel %vm1293, %v1319, 0.0
    %v1349 = vsel %vm1293, %v1321, 0.0
    %v1350 = vsel %vm1293, %v1323, 0.0
    %v1351 = vsel %vm1293, %v1325, 0.0
    %v1352 = vsel %vm1293, %v1327, 0.0
    %v1353 = vsel %vm1293, %v1329, 0.0
    %v1354 = vmax.f32 %v1208, %v1342
    %v1355 = vmax.f32 %v1209, %v1343
    %v1356 = vmax.f32 %v1210, %v1344
    %v1357 = vmax.f32 %v1211, %v1345
    %v1358 = vmax.f32 %v1212, %v1346
    %v1359 = vmax.f32 %v1213, %v1347
    %v1360 = vmax.f32 %v1214, %v1348
    %v1361 = vmax.f32 %v1215, %v1349
    %v1362 = vmax.f32 %v1216, %v1350
    %v1363 = vmax.f32 %v1217, %v1351
    %v1364 = vmax.f32 %v1218, %v1352
    %v1365 = vmax.f32 %v1219, %v1353
    %1366 = vrot.lane.b32.xlu0 %v1280, 97
    %v1367 = vpop.permute.xlu0 %1366
    %1368 = vrot.lane.b32.xlu0 %v1281, 97
    %v1369 = vpop.permute.xlu0 %1368
    %1370 = vrot.lane.b32.xlu0 %v1282, 97
    %v1371 = vpop.permute.xlu0 %1370
    %1372 = vrot.lane.b32.xlu0 %v1283, 97
    %v1373 = vpop.permute.xlu0 %1372
    %1374 = vrot.lane.b32.xlu0 %v1284, 97
    %v1375 = vpop.permute.xlu0 %1374
    %1376 = vrot.lane.b32.xlu0 %v1285, 97
    %v1377 = vpop.permute.xlu0 %1376
    %1378 = vrot.lane.b32.xlu0 %v1286, 97
    %v1379 = vpop.permute.xlu0 %1378
    %1380 = vrot.lane.b32.xlu0 %v1287, 97
    %v1381 = vpop.permute.xlu0 %1380
    %1382 = vrot.lane.b32.xlu0 %v1288, 97
    %v1383 = vpop.permute.xlu0 %1382
    %1384 = vrot.lane.b32.xlu0 %v1289, 97
    %v1385 = vpop.permute.xlu0 %1384
    %1386 = vrot.lane.b32.xlu0 %v1290, 97
    %v1387 = vpop.permute.xlu0 %1386
    %1388 = vrot.lane.b32.xlu0 %v1291, 97
    %v1389 = vpop.permute.xlu0 %1388
    %v1402 = vsel %vm473, %v1367, 0.0
    %v1403 = vsel %vm473, %v1369, 0.0
    %v1404 = vsel %vm473, %v1371, 0.0
    %v1405 = vsel %vm473, %v1373, 0.0
    %v1406 = vsel %vm473, %v1375, 0.0
    %v1407 = vsel %vm473, %v1377, 0.0
    %v1408 = vsel %vm473, %v1379, 0.0
    %v1409 = vsel %vm473, %v1381, 0.0
    %v1410 = vsel %vm473, %v1383, 0.0
    %v1411 = vsel %vm473, %v1385, 0.0
    %v1412 = vsel %vm473, %v1387, 0.0
    %v1413 = vsel %vm473, %v1389, 0.0
    %v1414 = vmax.f32 %v1354, %v1402
    %v1415 = vmax.f32 %v1355, %v1403
    %v1416 = vmax.f32 %v1356, %v1404
    %v1417 = vmax.f32 %v1357, %v1405
    %v1418 = vmax.f32 %v1358, %v1406
    %v1419 = vmax.f32 %v1359, %v1407
    %v1420 = vmax.f32 %v1360, %v1408
    %v1421 = vmax.f32 %v1361, %v1409
    %v1422 = vmax.f32 %v1362, %v1410
    %v1423 = vmax.f32 %v1363, %v1411
    %v1424 = vmax.f32 %v1364, %v1412
    %v1425 = vmax.f32 %v1365, %v1413
    %1426 = vrot.lane.b32.xlu0 %v1280, 127
    %v1427 = vpop.permute.xlu0 %1426
    %1428 = vrot.lane.b32.xlu0 %v1281, 127
    %v1429 = vpop.permute.xlu0 %1428
    %1430 = vrot.lane.b32.xlu0 %v1282, 127
    %v1431 = vpop.permute.xlu0 %1430
    %1432 = vrot.lane.b32.xlu0 %v1283, 127
    %v1433 = vpop.permute.xlu0 %1432
    %1434 = vrot.lane.b32.xlu0 %v1284, 127
    %v1435 = vpop.permute.xlu0 %1434
    %1436 = vrot.lane.b32.xlu0 %v1285, 127
    %v1437 = vpop.permute.xlu0 %1436
    %1438 = vrot.lane.b32.xlu0 %v1286, 127
    %v1439 = vpop.permute.xlu0 %1438
    %1440 = vrot.lane.b32.xlu0 %v1287, 127
    %v1441 = vpop.permute.xlu0 %1440
    %1442 = vrot.lane.b32.xlu0 %v1288, 127
    %v1443 = vpop.permute.xlu0 %1442
    %1444 = vrot.lane.b32.xlu0 %v1289, 127
    %v1445 = vpop.permute.xlu0 %1444
    %1446 = vrot.lane.b32.xlu0 %v1290, 127
    %v1447 = vpop.permute.xlu0 %1446
    %1448 = vrot.lane.b32.xlu0 %v1291, 127
    %v1449 = vpop.permute.xlu0 %1448
    %v1462 = vsel %vm547, %v1427, 0.0
    %v1463 = vsel %vm547, %v1429, 0.0
    %v1464 = vsel %vm547, %v1431, 0.0
    %v1465 = vsel %vm547, %v1433, 0.0
    %v1466 = vsel %vm547, %v1435, 0.0
    %v1467 = vsel %vm547, %v1437, 0.0
    %v1468 = vsel %vm547, %v1439, 0.0
    %v1469 = vsel %vm547, %v1441, 0.0
    %v1470 = vsel %vm547, %v1443, 0.0
    %v1471 = vsel %vm547, %v1445, 0.0
    %v1472 = vsel %vm547, %v1447, 0.0
    %v1473 = vsel %vm547, %v1449, 0.0
    %v1474 = vmax.f32 %v1414, %v1462
    %v1475 = vmax.f32 %v1415, %v1463
    %v1476 = vmax.f32 %v1416, %v1464
    %v1477 = vmax.f32 %v1417, %v1465
    %v1478 = vmax.f32 %v1418, %v1466
    %v1479 = vmax.f32 %v1419, %v1467
    %v1480 = vmax.f32 %v1420, %v1468
    %v1481 = vmax.f32 %v1421, %v1469
    %v1482 = vmax.f32 %v1422, %v1470
    %v1483 = vmax.f32 %v1423, %v1471
    %v1484 = vmax.f32 %v1424, %v1472
    %v1485 = vmax.f32 %v1425, %v1473
    %v1486 = vsel %vm104, 1, 0
    %vm1487 = vcmp.eq.s32.totalorder %v1486, 1
    %1488 = vrot.lane.b32.xlu0 %v1280, 126
    %v1489 = vpop.permute.xlu0 %1488
    %1490 = vrot.lane.b32.xlu0 %v1281, 126
    %v1491 = vpop.permute.xlu0 %1490
    %1492 = vrot.lane.b32.xlu0 %v1282, 126
    %v1493 = vpop.permute.xlu0 %1492
    %1494 = vrot.lane.b32.xlu0 %v1283, 126
    %v1495 = vpop.permute.xlu0 %1494
    %1496 = vrot.lane.b32.xlu0 %v1284, 126
    %v1497 = vpop.permute.xlu0 %1496
    %1498 = vrot.lane.b32.xlu0 %v1285, 126
    %v1499 = vpop.permute.xlu0 %1498
    %1500 = vrot.lane.b32.xlu0 %v1286, 126
    %v1501 = vpop.permute.xlu0 %1500
    %1502 = vrot.lane.b32.xlu0 %v1287, 126
    %v1503 = vpop.permute.xlu0 %1502
    %1504 = vrot.lane.b32.xlu0 %v1288, 126
    %v1505 = vpop.permute.xlu0 %1504
    %1506 = vrot.lane.b32.xlu0 %v1289, 126
    %v1507 = vpop.permute.xlu0 %1506
    %1508 = vrot.lane.b32.xlu0 %v1290, 126
    %v1509 = vpop.permute.xlu0 %1508
    %1510 = vrot.lane.b32.xlu0 %v1291, 126
    %v1511 = vpop.permute.xlu0 %1510
    %v1524 = vsel %vm1487, %v1489, 0.0
    %v1525 = vsel %vm1487, %v1491, 0.0
    %v1526 = vsel %vm1487, %v1493, 0.0
    %v1527 = vsel %vm1487, %v1495, 0.0
    %v1528 = vsel %vm1487, %v1497, 0.0
    %v1529 = vsel %vm1487, %v1499, 0.0
    %v1530 = vsel %vm1487, %v1501, 0.0
    %v1531 = vsel %vm1487, %v1503, 0.0
    %v1532 = vsel %vm1487, %v1505, 0.0
    %v1533 = vsel %vm1487, %v1507, 0.0
    %v1534 = vsel %vm1487, %v1509, 0.0
    %v1535 = vsel %vm1487, %v1511, 0.0
    %v1536 = vmax.f32 %v1474, %v1524
    %v1537 = vmax.f32 %v1475, %v1525
    %v1538 = vmax.f32 %v1476, %v1526
    %v1539 = vmax.f32 %v1477, %v1527
    %v1540 = vmax.f32 %v1478, %v1528
    %v1541 = vmax.f32 %v1479, %v1529
    %v1542 = vmax.f32 %v1480, %v1530
    %v1543 = vmax.f32 %v1481, %v1531
    %v1544 = vmax.f32 %v1482, %v1532
    %v1545 = vmax.f32 %v1483, %v1533
    %v1546 = vmax.f32 %v1484, %v1534
    %v1547 = vmax.f32 %v1485, %v1535
    %v1548 = vmul.f32 %v938, %v1536
    %v1549 = vmul.f32 %v939, %v1537
    %v1550 = vmul.f32 %v940, %v1538
    %v1551 = vmul.f32 %v941, %v1539
    %v1552 = vmul.f32 %v942, %v1540
    %v1553 = vmul.f32 %v943, %v1541
    %v1554 = vmul.f32 %v944, %v1542
    %v1555 = vmul.f32 %v945, %v1543
    %v1556 = vmul.f32 %v946, %v1544
    %v1557 = vmul.f32 %v947, %v1545
    %v1558 = vmul.f32 %v948, %v1546
    %v1559 = vmul.f32 %v949, %v1547
    %v1560 = vsel %vm117, %v1548, 0.0
    %v1561 = vsel %vm117, %v1549, 0.0
    %v1562 = vadd.f32 %v1560, %v1561
    %v1563 = vsel %vm117, %v1550, 0.0
    %v1564 = vadd.f32 %v1562, %v1563
    %v1565 = vrot.slane %v1564, 4
    %v1566 = vadd.f32 %v1564, %v1565
    %v1567 = vrot.slane %v1566, 2
    %v1568 = vadd.f32 %v1566, %v1567
    %v1569 = vrot.slane %v1568, 1
    %v1570 = vadd.f32 %v1568, %v1569
    %v1571 = vsel %vm117, %v1551, 0.0
    %v1572 = vsel %vm117, %v1552, 0.0
    %v1573 = vadd.f32 %v1571, %v1572
    %v1574 = vsel %vm117, %v1553, 0.0
    %v1575 = vadd.f32 %v1573, %v1574
    %v1576 = vrot.slane %v1575, 4
    %v1577 = vadd.f32 %v1575, %v1576
    %v1578 = vrot.slane %v1577, 2
    %v1579 = vadd.f32 %v1577, %v1578
    %v1580 = vrot.slane %v1579, 1
    %v1581 = vadd.f32 %v1579, %v1580
    %v1582 = vsel %vm117, %v1554, 0.0
    %v1583 = vsel %vm117, %v1555, 0.0
    %v1584 = vadd.f32 %v1582, %v1583
    %v1585 = vsel %vm117, %v1556, 0.0
    %v1586 = vadd.f32 %v1584, %v1585
    %v1587 = vrot.slane %v1586, 4
    %v1588 = vadd.f32 %v1586, %v1587
    %v1589 = vrot.slane %v1588, 2
    %v1590 = vadd.f32 %v1588, %v1589
    %v1591 = vrot.slane %v1590, 1
    %v1592 = vadd.f32 %v1590, %v1591
    %v1593 = vsel %vm117, %v1557, 0.0
    %v1594 = vsel %vm117, %v1558, 0.0
    %v1595 = vadd.f32 %v1593, %v1594
    %v1596 = vsel %vm117, %v1559, 0.0
    %v1597 = vadd.f32 %v1595, %v1596
    %v1598 = vrot.slane %v1597, 4
    %v1599 = vadd.f32 %v1597, %v1598
    %v1600 = vrot.slane %v1599, 2
    %v1601 = vadd.f32 %v1599, %v1600
    %v1602 = vrot.slane %v1601, 1
    %v1603 = vadd.f32 %v1601, %v1602
    %v1608 = vsel %vm1010, %v1581, %v1570
    %v1609 = vsel %vm1012, %v1592, %v1608
    %v1610 = vsel %vm1014, %v1603, %v1609
    %1612 = vst.msk [vmem:[#allocation7] sm:$0xf] %vm1018, %v1610
    %v1613 = vrot.slane %v920, 6
    %v1614 = vrot.slane %v923, 6
    %v1615 = vrot.slane %v926, 6
    %v1616 = vrot.slane %v929, 6
    %v1617 = vrot.slane %v921, 6
    %v1618 = vrot.slane %v924, 6
    %v1619 = vrot.slane %v927, 6
    %v1620 = vrot.slane %v930, 6
    %v1621 = vrot.slane %v922, 6
    %v1622 = vrot.slane %v925, 6
    %v1623 = vrot.slane %v928, 6
    %v1624 = vrot.slane %v931, 6
    %v1625 = vsel %vm1086, %v1617, %v1621
    %v1626 = vsel %vm1086, %v1618, %v1622
    %v1627 = vsel %vm1086, %v1619, %v1623
    %v1628 = vsel %vm1086, %v1620, %v1624
    %v1629 = vsel %vm1086, %v1613, %v1617
    %v1630 = vsel %vm1086, %v1614, %v1618
    %v1631 = vsel %vm1086, %v1615, %v1619
    %v1632 = vsel %vm1086, %v1616, %v1620
    %v1633 = vsel %vm1086, %v1621, %v1613
    %v1634 = vsel %vm1086, %v1622, %v1614
    %v1635 = vsel %vm1086, %v1623, %v1615
    %v1636 = vsel %vm1086, %v1624, %v1616
    %v1637 = vmax.f32 %v920, %v1633
    %v1638 = vmax.f32 %v921, %v1629
    %v1639 = vmax.f32 %v922, %v1625
    %v1640 = vmax.f32 %v923, %v1634
    %v1641 = vmax.f32 %v924, %v1630
    %v1642 = vmax.f32 %v925, %v1626
    %v1643 = vmax.f32 %v926, %v1635
    %v1644 = vmax.f32 %v927, %v1631
    %v1645 = vmax.f32 %v928, %v1627
    %v1646 = vmax.f32 %v929, %v1636
    %v1647 = vmax.f32 %v930, %v1632
    %v1648 = vmax.f32 %v931, %v1628
    %v1649 = vrot.slane %v920, 7
    %v1650 = vrot.slane %v923, 7
    %v1651 = vrot.slane %v926, 7
    %v1652 = vrot.slane %v929, 7
    %v1653 = vrot.slane %v921, 7
    %v1654 = vrot.slane %v924, 7
    %v1655 = vrot.slane %v927, 7
    %v1656 = vrot.slane %v930, 7
    %v1657 = vrot.slane %v922, 7
    %v1658 = vrot.slane %v925, 7
    %v1659 = vrot.slane %v928, 7
    %v1660 = vrot.slane %v931, 7
    %v1661 = vsel %vm337, %v1653, %v1657
    %v1662 = vsel %vm337, %v1654, %v1658
    %v1663 = vsel %vm337, %v1655, %v1659
    %v1664 = vsel %vm337, %v1656, %v1660
    %v1665 = vsel %vm337, %v1649, %v1653
    %v1666 = vsel %vm337, %v1650, %v1654
    %v1667 = vsel %vm337, %v1651, %v1655
    %v1668 = vsel %vm337, %v1652, %v1656
    %v1669 = vsel %vm337, %v1657, %v1649
    %v1670 = vsel %vm337, %v1658, %v1650
    %v1671 = vsel %vm337, %v1659, %v1651
    %v1672 = vsel %vm337, %v1660, %v1652
    %v1673 = vmax.f32 %v1637, %v1669
    %v1674 = vmax.f32 %v1638, %v1665
    %v1675 = vmax.f32 %v1639, %v1661
    %v1676 = vmax.f32 %v1640, %v1670
    %v1677 = vmax.f32 %v1641, %v1666
    %v1678 = vmax.f32 %v1642, %v1662
    %v1679 = vmax.f32 %v1643, %v1671
    %v1680 = vmax.f32 %v1644, %v1667
    %v1681 = vmax.f32 %v1645, %v1663
    %v1682 = vmax.f32 %v1646, %v1672
    %v1683 = vmax.f32 %v1647, %v1668
    %v1684 = vmax.f32 %v1648, %v1664
    %v1685 = vrot.slane %v920, 1
    %v1686 = vrot.slane %v923, 1
    %v1687 = vrot.slane %v926, 1
    %v1688 = vrot.slane %v929, 1
    %v1689 = vrot.slane %v921, 1
    %v1690 = vrot.slane %v924, 1
    %v1691 = vrot.slane %v927, 1
    %v1692 = vrot.slane %v930, 1
    %v1693 = vrot.slane %v922, 1
    %v1694 = vrot.slane %v925, 1
    %v1695 = vrot.slane %v928, 1
    %v1696 = vrot.slane %v931, 1
    %v1697 = vsel %vm374, %v1689, %v1693
    %v1698 = vsel %vm374, %v1690, %v1694
    %v1699 = vsel %vm374, %v1691, %v1695
    %v1700 = vsel %vm374, %v1692, %v1696
    %v1701 = vsel %vm374, %v1685, %v1689
    %v1702 = vsel %vm374, %v1686, %v1690
    %v1703 = vsel %vm374, %v1687, %v1691
    %v1704 = vsel %vm374, %v1688, %v1692
    %v1705 = vsel %vm374, %v1693, %v1685
    %v1706 = vsel %vm374, %v1694, %v1686
    %v1707 = vsel %vm374, %v1695, %v1687
    %v1708 = vsel %vm374, %v1696, %v1688
    %v1709 = vmax.f32 %v1673, %v1701
    %v1710 = vmax.f32 %v1674, %v1697
    %v1711 = vmax.f32 %v1675, %v1705
    %v1712 = vmax.f32 %v1676, %v1702
    %v1713 = vmax.f32 %v1677, %v1698
    %v1714 = vmax.f32 %v1678, %v1706
    %v1715 = vmax.f32 %v1679, %v1703
    %v1716 = vmax.f32 %v1680, %v1699
    %v1717 = vmax.f32 %v1681, %v1707
    %v1718 = vmax.f32 %v1682, %v1704
    %v1719 = vmax.f32 %v1683, %v1700
    %v1720 = vmax.f32 %v1684, %v1708
    %v1721 = vrot.slane %v920, 2
    %v1722 = vrot.slane %v923, 2
    %v1723 = vrot.slane %v926, 2
    %v1724 = vrot.slane %v929, 2
    %v1725 = vrot.slane %v921, 2
    %v1726 = vrot.slane %v924, 2
    %v1727 = vrot.slane %v927, 2
    %v1728 = vrot.slane %v930, 2
    %v1729 = vrot.slane %v922, 2
    %v1730 = vrot.slane %v925, 2
    %v1731 = vrot.slane %v928, 2
    %v1732 = vrot.slane %v931, 2
    %v1733 = vsel %vm1195, %v1725, %v1729
    %v1734 = vsel %vm1195, %v1726, %v1730
    %v1735 = vsel %vm1195, %v1727, %v1731
    %v1736 = vsel %vm1195, %v1728, %v1732
    %v1737 = vsel %vm1195, %v1721, %v1725
    %v1738 = vsel %vm1195, %v1722, %v1726
    %v1739 = vsel %vm1195, %v1723, %v1727
    %v1740 = vsel %vm1195, %v1724, %v1728
    %v1741 = vsel %vm1195, %v1729, %v1721
    %v1742 = vsel %vm1195, %v1730, %v1722
    %v1743 = vsel %vm1195, %v1731, %v1723
    %v1744 = vsel %vm1195, %v1732, %v1724
    %v1745 = vmax.f32 %v1709, %v1737
    %v1746 = vmax.f32 %v1710, %v1733
    %v1747 = vmax.f32 %v1711, %v1741
    %v1748 = vmax.f32 %v1712, %v1738
    %v1749 = vmax.f32 %v1713, %v1734
    %v1750 = vmax.f32 %v1714, %v1742
    %v1751 = vmax.f32 %v1715, %v1739
    %v1752 = vmax.f32 %v1716, %v1735
    %v1753 = vmax.f32 %v1717, %v1743
    %v1754 = vmax.f32 %v1718, %v1740
    %v1755 = vmax.f32 %v1719, %v1736
    %v1756 = vmax.f32 %v1720, %v1744
    %1757 = vrot.lane.b32.xlu0 %v1745, 32
    %v1758 = vpop.permute.xlu0 %1757
    %v1759 = vsel %vm399, %v1758, %v1745
    %1760 = vrot.lane.b32.xlu0 %v1746, 32
    %v1761 = vpop.permute.xlu0 %1760
    %v1762 = vsel %vm399, %v1761, %v1746
    %1763 = vrot.lane.b32.xlu0 %v1747, 32
    %v1764 = vpop.permute.xlu0 %1763
    %v1765 = vsel %vm399, %v1764, %v1747
    %1766 = vrot.lane.b32.xlu0 %v1748, 32
    %v1767 = vpop.permute.xlu0 %1766
    %v1768 = vsel %vm399, %v1767, %v1748
    %1769 = vrot.lane.b32.xlu0 %v1749, 32
    %v1770 = vpop.permute.xlu0 %1769
    %v1771 = vsel %vm399, %v1770, %v1749
    %1772 = vrot.lane.b32.xlu0 %v1750, 32
    %v1773 = vpop.permute.xlu0 %1772
    %v1774 = vsel %vm399, %v1773, %v1750
    %1775 = vrot.lane.b32.xlu0 %v1751, 32
    %v1776 = vpop.permute.xlu0 %1775
    %v1777 = vsel %vm399, %v1776, %v1751
    %1778 = vrot.lane.b32.xlu0 %v1752, 32
    %v1779 = vpop.permute.xlu0 %1778
    %v1780 = vsel %vm399, %v1779, %v1752
    %1781 = vrot.lane.b32.xlu0 %v1753, 32
    %v1782 = vpop.permute.xlu0 %1781
    %v1783 = vsel %vm399, %v1782, %v1753
    %1784 = vrot.lane.b32.xlu0 %v1754, 32
    %v1785 = vpop.permute.xlu0 %1784
    %v1786 = vsel %vm399, %v1785, %v1754
    %1787 = vrot.lane.b32.xlu0 %v1755, 32
    %v1788 = vpop.permute.xlu0 %1787
    %v1789 = vsel %vm399, %v1788, %v1755
    %1790 = vrot.lane.b32.xlu0 %v1756, 32
    %v1791 = vpop.permute.xlu0 %1790
    %v1792 = vsel %vm399, %v1791, %v1756
    %1793 = vrot.lane.b32.xlu0 %v1759, 32
    %v1794 = vpop.permute.xlu0 %1793
    %1795 = vrot.lane.b32.xlu0 %v1762, 32
    %v1796 = vpop.permute.xlu0 %1795
    %1797 = vrot.lane.b32.xlu0 %v1765, 32
    %v1798 = vpop.permute.xlu0 %1797
    %1799 = vrot.lane.b32.xlu0 %v1768, 32
    %v1800 = vpop.permute.xlu0 %1799
    %1801 = vrot.lane.b32.xlu0 %v1771, 32
    %v1802 = vpop.permute.xlu0 %1801
    %1803 = vrot.lane.b32.xlu0 %v1774, 32
    %v1804 = vpop.permute.xlu0 %1803
    %1805 = vrot.lane.b32.xlu0 %v1777, 32
    %v1806 = vpop.permute.xlu0 %1805
    %1807 = vrot.lane.b32.xlu0 %v1780, 32
    %v1808 = vpop.permute.xlu0 %1807
    %1809 = vrot.lane.b32.xlu0 %v1783, 32
    %v1810 = vpop.permute.xlu0 %1809
    %1811 = vrot.lane.b32.xlu0 %v1786, 32
    %v1812 = vpop.permute.xlu0 %1811
    %1813 = vrot.lane.b32.xlu0 %v1789, 32
    %v1814 = vpop.permute.xlu0 %1813
    %1815 = vrot.lane.b32.xlu0 %v1792, 32
    %v1816 = vpop.permute.xlu0 %1815
    %v1817 = vsel %vm399, %v1794, %v1745
    %v1818 = vsel %vm399, %v1796, %v1746
    %v1819 = vsel %vm399, %v1798, %v1747
    %v1820 = vsel %vm399, %v1800, %v1748
    %v1821 = vsel %vm399, %v1802, %v1749
    %v1822 = vsel %vm399, %v1804, %v1750
    %v1823 = vsel %vm399, %v1806, %v1751
    %v1824 = vsel %vm399, %v1808, %v1752
    %v1825 = vsel %vm399, %v1810, %v1753
    %v1826 = vsel %vm399, %v1812, %v1754
    %v1827 = vsel %vm399, %v1814, %v1755
    %v1828 = vsel %vm399, %v1816, %v1756
    %1841 = vrot.lane.b32.xlu0 %v1817, 98
    %v1842 = vpop.permute.xlu0 %1841
    %1843 = vrot.lane.b32.xlu0 %v1818, 98
    %v1844 = vpop.permute.xlu0 %1843
    %1845 = vrot.lane.b32.xlu0 %v1819, 98
    %v1846 = vpop.permute.xlu0 %1845
    %1847 = vrot.lane.b32.xlu0 %v1820, 98
    %v1848 = vpop.permute.xlu0 %1847
    %1849 = vrot.lane.b32.xlu0 %v1821, 98
    %v1850 = vpop.permute.xlu0 %1849
    %1851 = vrot.lane.b32.xlu0 %v1822, 98
    %v1852 = vpop.permute.xlu0 %1851
    %1853 = vrot.lane.b32.xlu0 %v1823, 98
    %v1854 = vpop.permute.xlu0 %1853
    %1855 = vrot.lane.b32.xlu0 %v1824, 98
    %v1856 = vpop.permute.xlu0 %1855
    %1857 = vrot.lane.b32.xlu0 %v1825, 98
    %v1858 = vpop.permute.xlu0 %1857
    %1859 = vrot.lane.b32.xlu0 %v1826, 98
    %v1860 = vpop.permute.xlu0 %1859
    %1861 = vrot.lane.b32.xlu0 %v1827, 98
    %v1862 = vpop.permute.xlu0 %1861
    %1863 = vrot.lane.b32.xlu0 %v1828, 98
    %v1864 = vpop.permute.xlu0 %1863
    %v1877 = vsel %vm1293, %v1842, 0.0
    %v1878 = vsel %vm1293, %v1844, 0.0
    %v1879 = vsel %vm1293, %v1846, 0.0
    %v1880 = vsel %vm1293, %v1848, 0.0
    %v1881 = vsel %vm1293, %v1850, 0.0
    %v1882 = vsel %vm1293, %v1852, 0.0
    %v1883 = vsel %vm1293, %v1854, 0.0
    %v1884 = vsel %vm1293, %v1856, 0.0
    %v1885 = vsel %vm1293, %v1858, 0.0
    %v1886 = vsel %vm1293, %v1860, 0.0
    %v1887 = vsel %vm1293, %v1862, 0.0
    %v1888 = vsel %vm1293, %v1864, 0.0
    %v1889 = vmax.f32 %v1745, %v1877
    %v1890 = vmax.f32 %v1746, %v1878
    %v1891 = vmax.f32 %v1747, %v1879
    %v1892 = vmax.f32 %v1748, %v1880
    %v1893 = vmax.f32 %v1749, %v1881
    %v1894 = vmax.f32 %v1750, %v1882
    %v1895 = vmax.f32 %v1751, %v1883
    %v1896 = vmax.f32 %v1752, %v1884
    %v1897 = vmax.f32 %v1753, %v1885
    %v1898 = vmax.f32 %v1754, %v1886
    %v1899 = vmax.f32 %v1755, %v1887
    %v1900 = vmax.f32 %v1756, %v1888
    %1901 = vrot.lane.b32.xlu0 %v1817, 97
    %v1902 = vpop.permute.xlu0 %1901
    %1903 = vrot.lane.b32.xlu0 %v1818, 97
    %v1904 = vpop.permute.xlu0 %1903
    %1905 = vrot.lane.b32.xlu0 %v1819, 97
    %v1906 = vpop.permute.xlu0 %1905
    %1907 = vrot.lane.b32.xlu0 %v1820, 97
    %v1908 = vpop.permute.xlu0 %1907
    %1909 = vrot.lane.b32.xlu0 %v1821, 97
    %v1910 = vpop.permute.xlu0 %1909
    %1911 = vrot.lane.b32.xlu0 %v1822, 97
    %v1912 = vpop.permute.xlu0 %1911
    %1913 = vrot.lane.b32.xlu0 %v1823, 97
    %v1914 = vpop.permute.xlu0 %1913
    %1915 = vrot.lane.b32.xlu0 %v1824, 97
    %v1916 = vpop.permute.xlu0 %1915
    %1917 = vrot.lane.b32.xlu0 %v1825, 97
    %v1918 = vpop.permute.xlu0 %1917
    %1919 = vrot.lane.b32.xlu0 %v1826, 97
    %v1920 = vpop.permute.xlu0 %1919
    %1921 = vrot.lane.b32.xlu0 %v1827, 97
    %v1922 = vpop.permute.xlu0 %1921
    %1923 = vrot.lane.b32.xlu0 %v1828, 97
    %v1924 = vpop.permute.xlu0 %1923
    %v1937 = vsel %vm473, %v1902, 0.0
    %v1938 = vsel %vm473, %v1904, 0.0
    %v1939 = vsel %vm473, %v1906, 0.0
    %v1940 = vsel %vm473, %v1908, 0.0
    %v1941 = vsel %vm473, %v1910, 0.0
    %v1942 = vsel %vm473, %v1912, 0.0
    %v1943 = vsel %vm473, %v1914, 0.0
    %v1944 = vsel %vm473, %v1916, 0.0
    %v1945 = vsel %vm473, %v1918, 0.0
    %v1946 = vsel %vm473, %v1920, 0.0
    %v1947 = vsel %vm473, %v1922, 0.0
    %v1948 = vsel %vm473, %v1924, 0.0
    %v1949 = vmax.f32 %v1889, %v1937
    %v1950 = vmax.f32 %v1890, %v1938
    %v1951 = vmax.f32 %v1891, %v1939
    %v1952 = vmax.f32 %v1892, %v1940
    %v1953 = vmax.f32 %v1893, %v1941
    %v1954 = vmax.f32 %v1894, %v1942
    %v1955 = vmax.f32 %v1895, %v1943
    %v1956 = vmax.f32 %v1896, %v1944
    %v1957 = vmax.f32 %v1897, %v1945
    %v1958 = vmax.f32 %v1898, %v1946
    %v1959 = vmax.f32 %v1899, %v1947
    %v1960 = vmax.f32 %v1900, %v1948
    %1961 = vrot.lane.b32.xlu0 %v1817, 127
    %v1962 = vpop.permute.xlu0 %1961
    %1963 = vrot.lane.b32.xlu0 %v1818, 127
    %v1964 = vpop.permute.xlu0 %1963
    %1965 = vrot.lane.b32.xlu0 %v1819, 127
    %v1966 = vpop.permute.xlu0 %1965
    %1967 = vrot.lane.b32.xlu0 %v1820, 127
    %v1968 = vpop.permute.xlu0 %1967
    %1969 = vrot.lane.b32.xlu0 %v1821, 127
    %v1970 = vpop.permute.xlu0 %1969
    %1971 = vrot.lane.b32.xlu0 %v1822, 127
    %v1972 = vpop.permute.xlu0 %1971
    %1973 = vrot.lane.b32.xlu0 %v1823, 127
    %v1974 = vpop.permute.xlu0 %1973
    %1975 = vrot.lane.b32.xlu0 %v1824, 127
    %v1976 = vpop.permute.xlu0 %1975
    %1977 = vrot.lane.b32.xlu0 %v1825, 127
    %v1978 = vpop.permute.xlu0 %1977
    %1979 = vrot.lane.b32.xlu0 %v1826, 127
    %v1980 = vpop.permute.xlu0 %1979
    %1981 = vrot.lane.b32.xlu0 %v1827, 127
    %v1982 = vpop.permute.xlu0 %1981
    %1983 = vrot.lane.b32.xlu0 %v1828, 127
    %v1984 = vpop.permute.xlu0 %1983
    %v1997 = vsel %vm547, %v1962, 0.0
    %v1998 = vsel %vm547, %v1964, 0.0
    %v1999 = vsel %vm547, %v1966, 0.0
    %v2000 = vsel %vm547, %v1968, 0.0
    %v2001 = vsel %vm547, %v1970, 0.0
    %v2002 = vsel %vm547, %v1972, 0.0
    %v2003 = vsel %vm547, %v1974, 0.0
    %v2004 = vsel %vm547, %v1976, 0.0
    %v2005 = vsel %vm547, %v1978, 0.0
    %v2006 = vsel %vm547, %v1980, 0.0
    %v2007 = vsel %vm547, %v1982, 0.0
    %v2008 = vsel %vm547, %v1984, 0.0
    %v2009 = vmax.f32 %v1949, %v1997
    %v2010 = vmax.f32 %v1950, %v1998
    %v2011 = vmax.f32 %v1951, %v1999
    %v2012 = vmax.f32 %v1952, %v2000
    %v2013 = vmax.f32 %v1953, %v2001
    %v2014 = vmax.f32 %v1954, %v2002
    %v2015 = vmax.f32 %v1955, %v2003
    %v2016 = vmax.f32 %v1956, %v2004
    %v2017 = vmax.f32 %v1957, %v2005
    %v2018 = vmax.f32 %v1958, %v2006
    %v2019 = vmax.f32 %v1959, %v2007
    %v2020 = vmax.f32 %v1960, %v2008
    %2021 = vrot.lane.b32.xlu0 %v1817, 126
    %v2022 = vpop.permute.xlu0 %2021
    %2023 = vrot.lane.b32.xlu0 %v1818, 126
    %v2024 = vpop.permute.xlu0 %2023
    %2025 = vrot.lane.b32.xlu0 %v1819, 126
    %v2026 = vpop.permute.xlu0 %2025
    %2027 = vrot.lane.b32.xlu0 %v1820, 126
    %v2028 = vpop.permute.xlu0 %2027
    %2029 = vrot.lane.b32.xlu0 %v1821, 126
    %v2030 = vpop.permute.xlu0 %2029
    %2031 = vrot.lane.b32.xlu0 %v1822, 126
    %v2032 = vpop.permute.xlu0 %2031
    %2033 = vrot.lane.b32.xlu0 %v1823, 126
    %v2034 = vpop.permute.xlu0 %2033
    %2035 = vrot.lane.b32.xlu0 %v1824, 126
    %v2036 = vpop.permute.xlu0 %2035
    %2037 = vrot.lane.b32.xlu0 %v1825, 126
    %v2038 = vpop.permute.xlu0 %2037
    %2039 = vrot.lane.b32.xlu0 %v1826, 126
    %v2040 = vpop.permute.xlu0 %2039
    %2041 = vrot.lane.b32.xlu0 %v1827, 126
    %v2042 = vpop.permute.xlu0 %2041
    %2043 = vrot.lane.b32.xlu0 %v1828, 126
    %v2044 = vpop.permute.xlu0 %2043
    %v2057 = vsel %vm1487, %v2022, 0.0
    %v2058 = vsel %vm1487, %v2024, 0.0
    %v2059 = vsel %vm1487, %v2026, 0.0
    %v2060 = vsel %vm1487, %v2028, 0.0
    %v2061 = vsel %vm1487, %v2030, 0.0
    %v2062 = vsel %vm1487, %v2032, 0.0
    %v2063 = vsel %vm1487, %v2034, 0.0
    %v2064 = vsel %vm1487, %v2036, 0.0
    %v2065 = vsel %vm1487, %v2038, 0.0
    %v2066 = vsel %vm1487, %v2040, 0.0
    %v2067 = vsel %vm1487, %v2042, 0.0
    %v2068 = vsel %vm1487, %v2044, 0.0
    %v2069 = vmax.f32 %v2009, %v2057
    %v2070 = vmax.f32 %v2010, %v2058
    %v2071 = vmax.f32 %v2011, %v2059
    %v2072 = vmax.f32 %v2012, %v2060
    %v2073 = vmax.f32 %v2013, %v2061
    %v2074 = vmax.f32 %v2014, %v2062
    %v2075 = vmax.f32 %v2015, %v2063
    %v2076 = vmax.f32 %v2016, %v2064
    %v2077 = vmax.f32 %v2017, %v2065
    %v2078 = vmax.f32 %v2018, %v2066
    %v2079 = vmax.f32 %v2019, %v2067
    %v2080 = vmax.f32 %v2020, %v2068
    %v2081 = vmul.f32 %v950, %v2069
    %v2082 = vmul.f32 %v951, %v2070
    %v2083 = vmul.f32 %v952, %v2071
    %v2084 = vmul.f32 %v953, %v2072
    %v2085 = vmul.f32 %v954, %v2073
    %v2086 = vmul.f32 %v955, %v2074
    %v2087 = vmul.f32 %v956, %v2075
    %v2088 = vmul.f32 %v957, %v2076
    %v2089 = vmul.f32 %v958, %v2077
    %v2090 = vmul.f32 %v959, %v2078
    %v2091 = vmul.f32 %v960, %v2079
    %v2092 = vmul.f32 %v961, %v2080
    %v2093 = vsel %vm117, %v2081, 0.0
    %v2094 = vsel %vm117, %v2082, 0.0
    %v2095 = vadd.f32 %v2093, %v2094
    %v2096 = vsel %vm117, %v2083, 0.0
    %v2097 = vadd.f32 %v2095, %v2096
    %v2098 = vrot.slane %v2097, 4
    %v2099 = vadd.f32 %v2097, %v2098
    %v2100 = vrot.slane %v2099, 2
    %v2101 = vadd.f32 %v2099, %v2100
    %v2102 = vrot.slane %v2101, 1
    %v2103 = vadd.f32 %v2101, %v2102
    %v2104 = vsel %vm117, %v2084, 0.0
    %v2105 = vsel %vm117, %v2085, 0.0
    %v2106 = vadd.f32 %v2104, %v2105
    %v2107 = vsel %vm117, %v2086, 0.0
    %v2108 = vadd.f32 %v2106, %v2107
    %v2109 = vrot.slane %v2108, 4
    %v2110 = vadd.f32 %v2108, %v2109
    %v2111 = vrot.slane %v2110, 2
    %v2112 = vadd.f32 %v2110, %v2111
    %v2113 = vrot.slane %v2112, 1
    %v2114 = vadd.f32 %v2112, %v2113
    %v2115 = vsel %vm117, %v2087, 0.0
    %v2116 = vsel %vm117, %v2088, 0.0
    %v2117 = vadd.f32 %v2115, %v2116
    %v2118 = vsel %vm117, %v2089, 0.0
    %v2119 = vadd.f32 %v2117, %v2118
    %v2120 = vrot.slane %v2119, 4
    %v2121 = vadd.f32 %v2119, %v2120
    %v2122 = vrot.slane %v2121, 2
    %v2123 = vadd.f32 %v2121, %v2122
    %v2124 = vrot.slane %v2123, 1
    %v2125 = vadd.f32 %v2123, %v2124
    %v2126 = vsel %vm117, %v2090, 0.0
    %v2127 = vsel %vm117, %v2091, 0.0
    %v2128 = vadd.f32 %v2126, %v2127
    %v2129 = vsel %vm117, %v2092, 0.0
    %v2130 = vadd.f32 %v2128, %v2129
    %v2131 = vrot.slane %v2130, 4
    %v2132 = vadd.f32 %v2130, %v2131
    %v2133 = vrot.slane %v2132, 2
    %v2134 = vadd.f32 %v2132, %v2133
    %v2135 = vrot.slane %v2134, 1
    %v2136 = vadd.f32 %v2134, %v2135
    %v2141 = vsel %vm1010, %v2114, %v2103
    %v2142 = vsel %vm1012, %v2125, %v2141
    %v2143 = vsel %vm1014, %v2136, %v2142
    %s2145 = scalar_lea.vmem [#allocation7], 8
    %2146 = vst.msk [vmem:[%s2145] sm:$0xf] %vm1018, %v2143
    // Predicated region
    $region18: #{tpu_custom_call.1} parent=1 // pred_check
      _
    $region19: #{tpu_custom_call.1} parent=1 // pred_check_branch
      %2148 = sbr.rel (0) target = $region21
    $region20: #{tpu_custom_call.1} parent=1 // pred_region
      %2150 = vsyncadd [#allocation4], 0
      %s2151 = sshll.u32 [#allocation7], 4
      %s2152 = int_to_ptr.vmem [resolvable:$true] %s2151
      %s2153 = sshll.u32 %s2, 4
      %s2154 = int_to_ptr.hbm [resolvable:$true] %s2153
      %2159 = dma.vmem_to_hbm [thread:$0]  %s2152, 256, %s2154, [#allocation4], 64, 64, 4
    $region21: #{tpu_custom_call.1} parent=1 // pred_fallthru
      _
    // Predicated region
    $region22: #{tpu_custom_call.1} parent=1 // pred_check
      _
    $region23: #{tpu_custom_call.1} parent=1 // pred_check_branch
      %2161 = sbr.rel (0) target = $region25
    $region24: #{tpu_custom_call.1} parent=1 // pred_region
      %2163 = dma.done [#allocation4], 256
    $region25: #{tpu_custom_call.1} parent=1 // pred_fallthru
      _
    %2164 = vsyncpa [#allocation3], 1
    %2165 = vsyncpa [#allocation6], 1
    %2166 = vsyncpa [#allocation4], 1

</llo_original>
